<compile_context>
chip_gen: v6e
topology: v6e:2x2x1
jax: 0.10.0
libtpu: 0.0.40
codegen_flags: <defaults>
</compile_context>

<pallas_src>
import jax
import jax.numpy as jnp
from jax import lax
from jax.experimental import pallas as pl
from jax.experimental.pallas import tpu as pltpu


def _round_up(n, m):
    return ((n + m - 1) // m) * m


def _vmem_limit(need_bytes):
    # need + ~30% headroom, floored at the v5e default (16 MiB) and capped below the
    # smallest physical VMEM of any target generation (v7x: 64 MiB / TensorCore).
    return int(min(max(int(need_bytes * 1.3) + (2 << 20), 16 << 20), 60 << 20))


# --------------------------------------------------------------------------------------
# Kernels
# --------------------------------------------------------------------------------------
def _encoder_kernel_resident(alpha_ref, x_ref, w1_ref, b1_ref, w2_ref, b2_ref,
                             w3_ref, b3_ref, o_ref):
    """Whole layer-0 reduction in one block; weights stay resident across the grid."""
    a1 = alpha_ref[0]
    a2 = alpha_ref[1]

    # layer 0: Linear (bias + BN folded into w1/b1) -> PReLU   (f32 accumulation)
    h = jnp.dot(x_ref[...], w1_ref[...], preferred_element_type=jnp.float32)
    h = h + b1_ref[...]
    h = jnp.where(h > 0, h, a1 * h)

    # layer 1: Linear (folded) -> PReLU
    h = jnp.dot(h.astype(w2_ref.dtype), w2_ref[...],
                preferred_element_type=jnp.float32) + b2_ref[...]
    h = jnp.where(h > 0, h, a2 * h)

    # layer 2: final Linear to (lane-padded) latent_dim
    z = jnp.dot(h.astype(w3_ref.dtype), w3_ref[...],
                preferred_element_type=jnp.float32) + b3_ref[...]

    # F.normalize(z, p=2, dim=1): eps on the norm == eps^2 on the sum-of-squares
    sumsq = jnp.sum(z * z, axis=1, keepdims=True)
    o_ref[...] = z * lax.rsqrt(jnp.maximum(sumsq, 1e-24))


def _encoder_kernel_ktiled(alpha_ref, x_ref, w1_ref, b1_ref, w2_ref, b2_ref,
                           w3_ref, b3_ref, o_ref, acc_ref):
    """K-tiled layer-0 reduction (grid = (batch, K)); for v7x-sized VMEM budgets."""
    k = pl.program_id(1)

    @pl.when(k == 0)
    def _():
        acc_ref[...] = jnp.zeros_like(acc_ref)

    acc_ref[...] += jnp.dot(x_ref[...], w1_ref[...],
                            preferred_element_type=jnp.float32)

    @pl.when(k == pl.num_programs(1) - 1)
    def _():
        a1 = alpha_ref[0]
        a2 = alpha_ref[1]
        h = acc_ref[...] + b1_ref[...]
        h = jnp.where(h > 0, h, a1 * h)
        h = jnp.dot(h.astype(w2_ref.dtype), w2_ref[...],
                    preferred_element_type=jnp.float32) + b2_ref[...]
        h = jnp.where(h > 0, h, a2 * h)
        z = jnp.dot(h.astype(w3_ref.dtype), w3_ref[...],
                    preferred_element_type=jnp.float32) + b3_ref[...]
        sumsq = jnp.sum(z * z, axis=1, keepdims=True)
        o_ref[...] = z * lax.rsqrt(jnp.maximum(sumsq, 1e-24))


# --------------------------------------------------------------------------------------
# One-time weight preparation (hoisted out of the per-call path)
# --------------------------------------------------------------------------------------
def prepare_encoder_params(params, *, compute_dtype=jnp.bfloat16):
    """Fold BatchNorm (eval) + bias into each Linear, pad the final projection to a
    lane-dense multiple-of-128 width, and cast the weight matrices to compute_dtype.
    Biases stay f32 (they are added to the f32 matmul accumulator)."""
    (w1, b1, s1, t1, a1, w2, b2, s2, t2, a2, w3, b3) = params
    latent_dim = int(w3.shape[1])
    Lp = _round_up(latent_dim, 128)

    w1f = (w1 * s1).astype(compute_dtype)                 # (n_genes, H0)
    b1f = (b1 * s1 + t1).astype(jnp.float32)              # (1, H0)
    w2f = (w2 * s2).astype(compute_dtype)                 # (H0, H1)
    b2f = (b2 * s2 + t2).astype(jnp.float32)              # (1, H1)
    w3p = jnp.pad(w3, ((0, 0), (0, Lp - latent_dim))).astype(compute_dtype)
    b3p = jnp.pad(b3, ((0, 0), (0, Lp - latent_dim))).astype(jnp.float32)
    alphas = jnp.concatenate([a1.reshape(-1), a2.reshape(-1)]).astype(jnp.float32)

    return {"w1": w1f, "b1": b1f, "w2": w2f, "b2": b2f, "w3": w3p, "b3": b3p,
            "alphas": alphas, "latent_dim": latent_dim, "compute_dtype": compute_dtype}


# --------------------------------------------------------------------------------------
# Forward wrapper
# --------------------------------------------------------------------------------------
def encoder_forward(x, prepared, *, block_b=256, k_tile=None):
    w1, b1 = prepared["w1"], prepared["b1"]
    w2, b2 = prepared["w2"], prepared["b2"]
    w3, b3 = prepared["w3"], prepared["b3"]
    alphas = prepared["alphas"]
    latent_dim = prepared["latent_dim"]
    cdt = prepared["compute_dtype"]

    B, n_genes = x.shape
    H0, H1, Lp = w1.shape[1], w2.shape[1], w3.shape[1]
    itemsize = jnp.dtype(cdt).itemsize

    # ---- batch tiling: aim for >= 2 "parallel" grid steps (v7x has 2 TCs) ----------
    n_steps = max(2, -(-B // block_b))
    TB = min(_round_up(-(-B // n_steps), 8), _round_up(B, 8))
    Bp = _round_up(B, TB)
    xp = x if Bp == B else jnp.pad(x, ((0, Bp - B), (0, 0)))
    xp = xp.astype(cdt)

    # ---- resident vs K-tiled layer-0 path -------------------------------------------
    resident_ws = (w1.nbytes + w2.nbytes + w3.nbytes
                   + 2 * TB * n_genes * itemsize + 2 * TB * Lp * 4)
    if k_tile is None and resident_ws > (40 << 20):   # would not fit v7x's 64 MiB VMEM
        k_tile = 2048

    common_bytes = w2.nbytes + w3.nbytes + b1.nbytes + b2.nbytes + b3.nbytes
    cost = pl.CostEstimate(
        flops=2 * Bp * (n_genes * H0 + H0 * H1 + H1 * Lp),
        transcendentals=Bp,
        bytes_accessed=xp.nbytes + w1.nbytes + common_bytes + Bp * Lp * 4)

    def _wspec(shape, index_map, single_buffer):
        # Resident operands (constant index_map) never need double buffering.
        if single_buffer:
            return pl.BlockSpec(shape, index_map, pipeline_mode=pl.Buffered(1))
        return pl.BlockSpec(shape, index_map)

    if k_tile is None:
        # ------------------ resident-weight path (v5e/v6e or small n_genes) ---------
        def run(single_buffer):
            idx0 = lambda i: (0, 0)
            wf = 1 if single_buffer else 2
            need = (wf * (w1.nbytes + common_bytes)
                    + 2 * TB * n_genes * itemsize + 2 * TB * Lp * 4)
            return pl.pallas_call(
                _encoder_kernel_resident,
                out_shape=jax.ShapeDtypeStruct((Bp, Lp), jnp.float32),
                grid=(Bp // TB,),
                in_specs=[
                    pl.BlockSpec(memory_space=pltpu.MemorySpace.SMEM),    # PReLU alphas
                    pl.BlockSpec((TB, n_genes), lambda i: (i, 0)),        # x tile
                    _wspec((n_genes, H0), idx0, single_buffer),           # w1'
                    _wspec((1, H0), idx0, single_buffer),                 # b1'
                    _wspec((H0, H1), idx0, single_buffer),                # w2'
                    _wspec((1, H1), idx0, single_buffer),                 # b2'
                    _wspec((H1, Lp), idx0, single_buffer),                # w3 (padded)
                    _wspec((1, Lp), idx0, single_buffer),                 # b3 (padded)
                ],
                out_specs=pl.BlockSpec((TB, Lp), lambda i: (i, 0)),
                compiler_params=pltpu.CompilerParams(
                    dimension_semantics=("parallel",),
                    vmem_limit_bytes=_vmem_limit(need)),
                cost_estimate=cost,
            )(alphas, xp, w1, b1, w2, b2, w3, b3)
    else:
        # ------------------ K-tiled layer-0 path (v7x / very large n_genes) ---------
        tk = max(128, _round_up(min(int(k_tile), n_genes), 128))
        Kp = _round_up(n_genes, tk)
        # TODO(synk): hoist this zero-padding of w1 into prepare_encoder_params when
        # the deployment k_tile is known ahead of time.
        w1k = w1 if w1.shape[0] == Kp else jnp.pad(w1, ((0, Kp - n_genes), (0, 0)))
        xk = xp if Kp == n_genes else jnp.pad(xp, ((0, 0), (0, Kp - n_genes)))

        def run(single_buffer):
            idx0 = lambda i, k: (0, 0)
            wf = 1 if single_buffer else 2
            need = (2 * (TB * tk + tk * H0) * itemsize + wf * common_bytes
                    + TB * H0 * 4 + 2 * TB * Lp * 4)
            return pl.pallas_call(
                _encoder_kernel_ktiled,
                out_shape=jax.ShapeDtypeStruct((Bp, Lp), jnp.float32),
                grid=(Bp // TB, Kp // tk),
                in_specs=[
                    pl.BlockSpec(memory_space=pltpu.MemorySpace.SMEM),    # PReLU alphas
                    pl.BlockSpec((TB, tk), lambda i, k: (i, k)),          # x K-slice
                    pl.BlockSpec((tk, H0), lambda i, k: (k, 0)),          # w1' K-slice
                    _wspec((1, H0), idx0, single_buffer),                 # b1'
                    _wspec((H0, H1), idx0, single_buffer),                # w2'
                    _wspec((1, H1), idx0, single_buffer),                 # b2'
                    _wspec((H1, Lp), idx0, single_buffer),                # w3 (padded)
                    _wspec((1, Lp), idx0, single_buffer),                 # b3 (padded)
                ],
                out_specs=pl.BlockSpec((TB, Lp), lambda i, k: (i, 0)),
                scratch_shapes=[pltpu.VMEM((TB, H0), jnp.float32)],
                compiler_params=pltpu.CompilerParams(
                    dimension_semantics=("parallel", "arbitrary"),
                    vmem_limit_bytes=_vmem_limit(need)),
                cost_estimate=cost,
            )(alphas, xk, w1k, b1, w2, b2, w3, b3)

    try:
        out = run(single_buffer=True)
    except Exception:
        # Fallback if this jax build rejects pl.Buffered(1) on pallas_call inputs.
        out = run(single_buffer=False)

    return out[:B, :latent_dim]


# --------------------------------------------------------------------------------------
# Synthetic parameters + pure-JAX reference
# --------------------------------------------------------------------------------------
def make_params(key, n_genes, hidden_dim, latent_dim):
    """Deterministic synthetic parameter init (shapes from Encoder.__init__)."""
    keys = jax.random.split(key, 8)
    H0, H1 = hidden_dim

    def linear(kw, kb, fan_in, fan_out):
        bound = 1.0 / jnp.sqrt(fan_in)
        w = jax.random.uniform(kw, (fan_in, fan_out), jnp.float32, -bound, bound)
        b = jax.random.uniform(kb, (1, fan_out), jnp.float32, -bound, bound)
        return w, b

    w1, b1 = linear(keys[0], keys[1], n_genes, H0)
    w2, b2 = linear(keys[2], keys[3], H0, H1)
    w3, b3 = linear(keys[4], keys[5], H1, latent_dim)

    eps = 1e-5

    def bn_fold(h, kg):
        gamma = jnp.ones((1, h), jnp.float32)
        beta = jnp.zeros((1, h), jnp.float32)
        running_mean = jnp.zeros((1, h), jnp.float32)
        running_var = 1.0 + 0.1 * jax.random.uniform(kg, (1, h), jnp.float32)
        scale = gamma / jnp.sqrt(running_var + eps)
        shift = beta - running_mean * scale
        return scale, shift

    s1, t1 = bn_fold(H0, keys[6])
    s2, t2 = bn_fold(H1, keys[7])

    a1 = jnp.full((1, 1), 0.25, jnp.float32)   # PReLU default init
    a2 = jnp.full((1, 1), 0.25, jnp.float32)

    return (w1, b1, s1, t1, a1, w2, b2, s2, t2, a2, w3, b3)


def reference_forward(x, params):
    (w1, b1, s1, t1, a1, w2, b2, s2, t2, a2, w3, b3) = params
    h = x @ w1 + b1
    h = h * s1 + t1
    h = jnp.where(h > 0, h, a1 * h)
    h = h @ w2 + b2
    h = h * s2 + t2
    h = jnp.where(h > 0, h, a2 * h)
    z = h @ w3 + b3
    norm = jnp.sqrt(jnp.sum(z * z, axis=1, keepdims=True))
    return z / jnp.maximum(norm, 1e-12)


if __name__ == "__main__":
    B, n_genes, hidden_dim, latent_dim = 32, 200, [128, 128], 32

    key = jax.random.PRNGKey(0)
    k_x, k_p = jax.random.split(key)
    x = jax.random.normal(k_x, (B, n_genes), jnp.float32)
    params = make_params(k_p, n_genes, hidden_dim, latent_dim)
    ref = reference_forward(x, params)

    # f32 compute path (tight tolerance) — validates kernel math.
    prep_f32 = prepare_encoder_params(params, compute_dtype=jnp.float32)
    out_f32 = jax.block_until_ready(encoder_forward(x, prep_f32))
    assert out_f32.shape == (B, latent_dim)
    assert jnp.allclose(out_f32, ref, atol=2e-4, rtol=2e-4), "f32 path mismatch"

    # bf16 compute path (default: halves HBM traffic, MXU-native); looser tolerance.
    prep_bf16 = prepare_encoder_params(params)
    out_bf16 = jax.block_until_ready(encoder_forward(x, prep_bf16))
    assert out_bf16.shape == (B, latent_dim)
    assert jnp.allclose(out_bf16, ref, atol=2e-2, rtol=2e-2), "bf16 path mismatch"

    # K-tiled (v7x-style) path forced with a small k_tile so both kernels are exercised.
    out_kt = jax.block_until_ready(encoder_forward(x, prep_bf16, k_tile=128))
    assert out_kt.shape == (B, latent_dim)
    assert jnp.allclose(out_kt, ref, atol=2e-2, rtol=2e-2), "K-tiled path mismatch"

    print("KERNEL_OK")
</pallas_src>

<mosaic_0001>
module attributes {stable_mosaic.version = 11 : i64} {
  func.func @_encoder_kernel_resident(%arg0: i32, %arg1: memref<2xf32, #tpu.memory_space<smem>>, %arg2: memref<16x200xf32, #tpu.memory_space<vmem>>, %arg3: memref<200x128xf32, #tpu.memory_space<vmem>>, %arg4: memref<1x128xf32, #tpu.memory_space<vmem>>, %arg5: memref<128x128xf32, #tpu.memory_space<vmem>>, %arg6: memref<1x128xf32, #tpu.memory_space<vmem>>, %arg7: memref<128x128xf32, #tpu.memory_space<vmem>>, %arg8: memref<1x128xf32, #tpu.memory_space<vmem>>, %arg9: memref<16x128xf32, #tpu.memory_space<vmem>>) attributes {dimension_semantics = [#tpu.dimension_semantics<parallel>], iteration_bounds = array<i64: 2>, scalar_prefetch = 0 : i64, scratch_operands = 0 : i64, tpu.core_type = #tpu.core_type<tc>, window_params = [{transform_indices = @transform_0, window_bounds = array<i64: 2>}, {transform_indices = @transform_1, window_bounds = array<i64: 16, 200>}, {pipeline_mode = #tpu.pipeline_mode<synchronous>, transform_indices = @transform_2, window_bounds = array<i64: 200, 128>}, {pipeline_mode = #tpu.pipeline_mode<synchronous>, transform_indices = @transform_3, window_bounds = array<i64: 1, 128>}, {pipeline_mode = #tpu.pipeline_mode<synchronous>, transform_indices = @transform_4, window_bounds = array<i64: 128, 128>}, {pipeline_mode = #tpu.pipeline_mode<synchronous>, transform_indices = @transform_5, window_bounds = array<i64: 1, 128>}, {pipeline_mode = #tpu.pipeline_mode<synchronous>, transform_indices = @transform_6, window_bounds = array<i64: 128, 128>}, {pipeline_mode = #tpu.pipeline_mode<synchronous>, transform_indices = @transform_7, window_bounds = array<i64: 1, 128>}, {transform_indices = @transform_8, window_bounds = array<i64: 16, 128>}]} {
    %c0 = arith.constant 0 : index
    %0 = memref.load %arg1[%c0] : memref<2xf32, #tpu.memory_space<smem>>
    %c1 = arith.constant 1 : index
    %1 = memref.load %arg1[%c1] : memref<2xf32, #tpu.memory_space<smem>>
    %c0_0 = arith.constant 0 : index
    %c0_1 = arith.constant 0 : index
    %2 = vector.load %arg2[%c0_0, %c0_1] : memref<16x200xf32, #tpu.memory_space<vmem>>, vector<16x200xf32>
    %c0_2 = arith.constant 0 : index
    %c0_3 = arith.constant 0 : index
    %3 = vector.load %arg3[%c0_2, %c0_3] : memref<200x128xf32, #tpu.memory_space<vmem>>, vector<200x128xf32>
    %cst = arith.constant dense<0.000000e+00> : vector<16x128xf32>
    %4 = tpu.matmul %2, %3, %cst {dimension_numbers = #tpu.dot_dimension_numbers<[1], [0], [0], [1], [0, 0, 1, 1], [], []>} : vector<16x200xf32>, vector<200x128xf32>, vector<16x128xf32> -> vector<16x128xf32>
    %c0_4 = arith.constant 0 : index
    %c0_5 = arith.constant 0 : index
    %5 = vector.load %arg4[%c0_4, %c0_5] : memref<1x128xf32, #tpu.memory_space<vmem>>, vector<1x128xf32>
    %6 = vector.broadcast %5 : vector<1x128xf32> to vector<16x128xf32>
    %7 = arith.addf %4, %6 : vector<16x128xf32>
    %cst_6 = arith.constant 0.000000e+00 : f32
    %8 = vector.broadcast %cst_6 : f32 to vector<16x128xf32>
    %9 = arith.cmpf ogt, %7, %8 : vector<16x128xf32>
    %10 = vector.broadcast %0 : f32 to vector<16x128xf32>
    %11 = arith.mulf %10, %7 : vector<16x128xf32>
    %12 = arith.select %9, %7, %11 : vector<16x128xi1>, vector<16x128xf32>
    %c0_7 = arith.constant 0 : index
    %c0_8 = arith.constant 0 : index
    %13 = vector.load %arg5[%c0_7, %c0_8] : memref<128x128xf32, #tpu.memory_space<vmem>>, vector<128x128xf32>
    %cst_9 = arith.constant dense<0.000000e+00> : vector<16x128xf32>
    %14 = tpu.matmul %12, %13, %cst_9 {dimension_numbers = #tpu.dot_dimension_numbers<[1], [0], [0], [1], [0, 0, 1, 1], [], []>} : vector<16x128xf32>, vector<128x128xf32>, vector<16x128xf32> -> vector<16x128xf32>
    %c0_10 = arith.constant 0 : index
    %c0_11 = arith.constant 0 : index
    %15 = vector.load %arg6[%c0_10, %c0_11] : memref<1x128xf32, #tpu.memory_space<vmem>>, vector<1x128xf32>
    %16 = vector.broadcast %15 : vector<1x128xf32> to vector<16x128xf32>
    %17 = arith.addf %14, %16 : vector<16x128xf32>
    %cst_12 = arith.constant 0.000000e+00 : f32
    %18 = vector.broadcast %cst_12 : f32 to vector<16x128xf32>
    %19 = arith.cmpf ogt, %17, %18 : vector<16x128xf32>
    %20 = vector.broadcast %1 : f32 to vector<16x128xf32>
    %21 = arith.mulf %20, %17 : vector<16x128xf32>
    %22 = arith.select %19, %17, %21 : vector<16x128xi1>, vector<16x128xf32>
    %c0_13 = arith.constant 0 : index
    %c0_14 = arith.constant 0 : index
    %23 = vector.load %arg7[%c0_13, %c0_14] : memref<128x128xf32, #tpu.memory_space<vmem>>, vector<128x128xf32>
    %cst_15 = arith.constant dense<0.000000e+00> : vector<16x128xf32>
    %24 = tpu.matmul %22, %23, %cst_15 {dimension_numbers = #tpu.dot_dimension_numbers<[1], [0], [0], [1], [0, 0, 1, 1], [], []>} : vector<16x128xf32>, vector<128x128xf32>, vector<16x128xf32> -> vector<16x128xf32>
    %c0_16 = arith.constant 0 : index
    %c0_17 = arith.constant 0 : index
    %25 = vector.load %arg8[%c0_16, %c0_17] : memref<1x128xf32, #tpu.memory_space<vmem>>, vector<1x128xf32>
    %26 = vector.broadcast %25 : vector<1x128xf32> to vector<16x128xf32>
    %27 = arith.addf %24, %26 : vector<16x128xf32>
    %28 = arith.mulf %27, %27 : vector<16x128xf32>
    %cst_18 = arith.constant dense<0.000000e+00> : vector<16xf32>
    %29 = vector.multi_reduction <add>, %28, %cst_18 [1] : vector<16x128xf32> to vector<16xf32>
    %30 = vector.shape_cast %29 : vector<16xf32> to vector<16x1xf32>
    %cst_19 = arith.constant 1.000000e-24 : f32
    %31 = vector.broadcast %cst_19 : f32 to vector<16x1xf32>
    %32 = arith.maximumf %30, %31 : vector<16x1xf32>
    %33 = math.rsqrt %32 : vector<16x1xf32>
    %34 = vector.broadcast %33 : vector<16x1xf32> to vector<16x128xf32>
    %35 = arith.mulf %27, %34 : vector<16x128xf32>
    %c0_20 = arith.constant 0 : index
    %c0_21 = arith.constant 0 : index
    %36 = vector.load %arg9[%c0_20, %c0_21] : memref<16x128xf32, #tpu.memory_space<vmem>>, vector<16x128xf32>
    tpu.vector_store %arg9[%c0_20, %c0_21], %35 {strides = array<i32>} : memref<16x128xf32, #tpu.memory_space<vmem>>, vector<16x128xf32>,
    return
  }
  func.func @transform_0(%arg0: i32) -> i32 {
    %c0_i32 = arith.constant 0 : i32
    %c0_i32_0 = arith.constant 0 : i32
    return %c0_i32 : i32
  }
  func.func @transform_1(%arg0: i32) -> (i32, i32) {
    %c0_i32 = arith.constant 0 : i32
    %c0_i32_0 = arith.constant 0 : i32
    return %arg0, %c0_i32 : i32, i32
  }
  func.func @transform_2(%arg0: i32) -> (i32, i32) {
    %c0_i32 = arith.constant 0 : i32
    %c0_i32_0 = arith.constant 0 : i32
    %c0_i32_1 = arith.constant 0 : i32
    return %c0_i32, %c0_i32_0 : i32, i32
  }
  func.func @transform_3(%arg0: i32) -> (i32, i32) {
    %c0_i32 = arith.constant 0 : i32
    %c0_i32_0 = arith.constant 0 : i32
    %c0_i32_1 = arith.constant 0 : i32
    return %c0_i32, %c0_i32_0 : i32, i32
  }
  func.func @transform_4(%arg0: i32) -> (i32, i32) {
    %c0_i32 = arith.constant 0 : i32
    %c0_i32_0 = arith.constant 0 : i32
    %c0_i32_1 = arith.constant 0 : i32
    return %c0_i32, %c0_i32_0 : i32, i32
  }
  func.func @transform_5(%arg0: i32) -> (i32, i32) {
    %c0_i32 = arith.constant 0 : i32
    %c0_i32_0 = arith.constant 0 : i32
    %c0_i32_1 = arith.constant 0 : i32
    return %c0_i32, %c0_i32_0 : i32, i32
  }
  func.func @transform_6(%arg0: i32) -> (i32, i32) {
    %c0_i32 = arith.constant 0 : i32
    %c0_i32_0 = arith.constant 0 : i32
    %c0_i32_1 = arith.constant 0 : i32
    return %c0_i32, %c0_i32_0 : i32, i32
  }
  func.func @transform_7(%arg0: i32) -> (i32, i32) {
    %c0_i32 = arith.constant 0 : i32
    %c0_i32_0 = arith.constant 0 : i32
    %c0_i32_1 = arith.constant 0 : i32
    return %c0_i32, %c0_i32_0 : i32, i32
  }
  func.func @transform_8(%arg0: i32) -> (i32, i32) {
    %c0_i32 = arith.constant 0 : i32
    %c0_i32_0 = arith.constant 0 : i32
    return %arg0, %c0_i32 : i32, i32
  }
}

module attributes {stable_mosaic.version = 11 : i64} {
  func.func @_encoder_kernel_resident(%arg0: i32, %arg1: memref<2xf32, #tpu.memory_space<smem>>, %arg2: memref<16x200xf32, #tpu.memory_space<vmem>>, %arg3: memref<200x128xf32, #tpu.memory_space<vmem>>, %arg4: memref<1x128xf32, #tpu.memory_space<vmem>>, %arg5: memref<128x128xf32, #tpu.memory_space<vmem>>, %arg6: memref<1x128xf32, #tpu.memory_space<vmem>>, %arg7: memref<128x128xf32, #tpu.memory_space<vmem>>, %arg8: memref<1x128xf32, #tpu.memory_space<vmem>>, %arg9: memref<16x128xf32, #tpu.memory_space<vmem>>) attributes {dimension_semantics = [#tpu.dimension_semantics<parallel>], iteration_bounds = array<i64: 2>, scalar_prefetch = 0 : i64, scratch_operands = 0 : i64, tpu.core_type = #tpu.core_type<tc>, window_params = [{transform_indices = @transform_0, window_bounds = array<i64: 2>}, {transform_indices = @transform_1, window_bounds = array<i64: 16, 200>}, {pipeline_mode = #tpu.pipeline_mode<synchronous>, transform_indices = @transform_2, window_bounds = array<i64: 200, 128>}, {pipeline_mode = #tpu.pipeline_mode<synchronous>, transform_indices = @transform_3, window_bounds = array<i64: 1, 128>}, {pipeline_mode = #tpu.pipeline_mode<synchronous>, transform_indices = @transform_4, window_bounds = array<i64: 128, 128>}, {pipeline_mode = #tpu.pipeline_mode<synchronous>, transform_indices = @transform_5, window_bounds = array<i64: 1, 128>}, {pipeline_mode = #tpu.pipeline_mode<synchronous>, transform_indices = @transform_6, window_bounds = array<i64: 128, 128>}, {pipeline_mode = #tpu.pipeline_mode<synchronous>, transform_indices = @transform_7, window_bounds = array<i64: 1, 128>}, {transform_indices = @transform_8, window_bounds = array<i64: 16, 128>}]} {
    %c0 = arith.constant 0 : index
    %0 = memref.load %arg1[%c0] : memref<2xf32, #tpu.memory_space<smem>>
    %c1 = arith.constant 1 : index
    %1 = memref.load %arg1[%c1] : memref<2xf32, #tpu.memory_space<smem>>
    %c0_0 = arith.constant 0 : index
    %c0_1 = arith.constant 0 : index
    %2 = vector.load %arg2[%c0_0, %c0_1] : memref<16x200xf32, #tpu.memory_space<vmem>>, vector<16x200xf32>
    %c0_2 = arith.constant 0 : index
    %c0_3 = arith.constant 0 : index
    %3 = vector.load %arg3[%c0_2, %c0_3] : memref<200x128xf32, #tpu.memory_space<vmem>>, vector<200x128xf32>
    %cst = arith.constant dense<0.000000e+00> : vector<16x128xf32>
    %4 = tpu.matmul %2, %3, %cst {dimension_numbers = #tpu.dot_dimension_numbers<[1], [0], [0], [1], [0, 0, 1, 1], [], []>} : vector<16x200xf32>, vector<200x128xf32>, vector<16x128xf32> -> vector<16x128xf32>
    %c0_4 = arith.constant 0 : index
    %c0_5 = arith.constant 0 : index
    %5 = vector.load %arg4[%c0_4, %c0_5] : memref<1x128xf32, #tpu.memory_space<vmem>>, vector<1x128xf32>
    %6 = vector.broadcast %5 : vector<1x128xf32> to vector<16x128xf32>
    %7 = arith.addf %4, %6 : vector<16x128xf32>
    %cst_6 = arith.constant 0.000000e+00 : f32
    %8 = vector.broadcast %cst_6 : f32 to vector<16x128xf32>
    %9 = arith.cmpf ogt, %7, %8 : vector<16x128xf32>
    %10 = vector.broadcast %0 : f32 to vector<16x128xf32>
    %11 = arith.mulf %10, %7 : vector<16x128xf32>
    %12 = arith.select %9, %7, %11 : vector<16x128xi1>, vector<16x128xf32>
    %c0_7 = arith.constant 0 : index
    %c0_8 = arith.constant 0 : index
    %13 = vector.load %arg5[%c0_7, %c0_8] : memref<128x128xf32, #tpu.memory_space<vmem>>, vector<128x128xf32>
    %cst_9 = arith.constant dense<0.000000e+00> : vector<16x128xf32>
    %14 = tpu.matmul %12, %13, %cst_9 {dimension_numbers = #tpu.dot_dimension_numbers<[1], [0], [0], [1], [0, 0, 1, 1], [], []>} : vector<16x128xf32>, vector<128x128xf32>, vector<16x128xf32> -> vector<16x128xf32>
    %c0_10 = arith.constant 0 : index
    %c0_11 = arith.constant 0 : index
    %15 = vector.load %arg6[%c0_10, %c0_11] : memref<1x128xf32, #tpu.memory_space<vmem>>, vector<1x128xf32>
    %16 = vector.broadcast %15 : vector<1x128xf32> to vector<16x128xf32>
    %17 = arith.addf %14, %16 : vector<16x128xf32>
    %cst_12 = arith.constant 0.000000e+00 : f32
    %18 = vector.broadcast %cst_12 : f32 to vector<16x128xf32>
    %19 = arith.cmpf ogt, %17, %18 : vector<16x128xf32>
    %20 = vector.broadcast %1 : f32 to vector<16x128xf32>
    %21 = arith.mulf %20, %17 : vector<16x128xf32>
    %22 = arith.select %19, %17, %21 : vector<16x128xi1>, vector<16x128xf32>
    %c0_13 = arith.constant 0 : index
    %c0_14 = arith.constant 0 : index
    %23 = vector.load %arg7[%c0_13, %c0_14] : memref<128x128xf32, #tpu.memory_space<vmem>>, vector<128x128xf32>
    %cst_15 = arith.constant dense<0.000000e+00> : vector<16x128xf32>
    %24 = tpu.matmul %22, %23, %cst_15 {dimension_numbers = #tpu.dot_dimension_numbers<[1], [0], [0], [1], [0, 0, 1, 1], [], []>} : vector<16x128xf32>, vector<128x128xf32>, vector<16x128xf32> -> vector<16x128xf32>
    %c0_16 = arith.constant 0 : index
    %c0_17 = arith.constant 0 : index
    %25 = vector.load %arg8[%c0_16, %c0_17] : memref<1x128xf32, #tpu.memory_space<vmem>>, vector<1x128xf32>
    %26 = vector.broadcast %25 : vector<1x128xf32> to vector<16x128xf32>
    %27 = arith.addf %24, %26 : vector<16x128xf32>
    %28 = arith.mulf %27, %27 : vector<16x128xf32>
    %cst_18 = arith.constant dense<0.000000e+00> : vector<16xf32>
    %29 = vector.multi_reduction <add>, %28, %cst_18 [1] : vector<16x128xf32> to vector<16xf32>
    %30 = vector.shape_cast %29 : vector<16xf32> to vector<16x1xf32>
    %cst_19 = arith.constant 1.000000e-24 : f32
    %31 = vector.broadcast %cst_19 : f32 to vector<16x1xf32>
    %32 = arith.maximumf %30, %31 : vector<16x1xf32>
    %33 = math.rsqrt %32 : vector<16x1xf32>
    %34 = vector.broadcast %33 : vector<16x1xf32> to vector<16x128xf32>
    %35 = arith.mulf %27, %34 : vector<16x128xf32>
    %c0_20 = arith.constant 0 : index
    %c0_21 = arith.constant 0 : index
    %36 = vector.load %arg9[%c0_20, %c0_21] : memref<16x128xf32, #tpu.memory_space<vmem>>, vector<16x128xf32>
    tpu.vector_store %arg9[%c0_20, %c0_21], %35 {strides = array<i32>} : memref<16x128xf32, #tpu.memory_space<vmem>>, vector<16x128xf32>,
    return
  }
  func.func @transform_0(%arg0: i32) -> i32 {
    %c0_i32 = arith.constant 0 : i32
    %c0_i32_0 = arith.constant 0 : i32
    return %c0_i32 : i32
  }
  func.func @transform_1(%arg0: i32) -> (i32, i32) {
    %c0_i32 = arith.constant 0 : i32
    %c0_i32_0 = arith.constant 0 : i32
    return %arg0, %c0_i32 : i32, i32
  }
  func.func @transform_2(%arg0: i32) -> (i32, i32) {
    %c0_i32 = arith.constant 0 : i32
    %c0_i32_0 = arith.constant 0 : i32
    %c0_i32_1 = arith.constant 0 : i32
    return %c0_i32, %c0_i32_0 : i32, i32
  }
  func.func @transform_3(%arg0: i32) -> (i32, i32) {
    %c0_i32 = arith.constant 0 : i32
    %c0_i32_0 = arith.constant 0 : i32
    %c0_i32_1 = arith.constant 0 : i32
    return %c0_i32, %c0_i32_0 : i32, i32
  }
  func.func @transform_4(%arg0: i32) -> (i32, i32) {
    %c0_i32 = arith.constant 0 : i32
    %c0_i32_0 = arith.constant 0 : i32
    %c0_i32_1 = arith.constant 0 : i32
    return %c0_i32, %c0_i32_0 : i32, i32
  }
  func.func @transform_5(%arg0: i32) -> (i32, i32) {
    %c0_i32 = arith.constant 0 : i32
    %c0_i32_0 = arith.constant 0 : i32
    %c0_i32_1 = arith.constant 0 : i32
    return %c0_i32, %c0_i32_0 : i32, i32
  }
  func.func @transform_6(%arg0: i32) -> (i32, i32) {
    %c0_i32 = arith.constant 0 : i32
    %c0_i32_0 = arith.constant 0 : i32
    %c0_i32_1 = arith.constant 0 : i32
    return %c0_i32, %c0_i32_0 : i32, i32
  }
  func.func @transform_7(%arg0: i32) -> (i32, i32) {
    %c0_i32 = arith.constant 0 : i32
    %c0_i32_0 = arith.constant 0 : i32
    %c0_i32_1 = arith.constant 0 : i32
    return %c0_i32, %c0_i32_0 : i32, i32
  }
  func.func @transform_8(%arg0: i32) -> (i32, i32) {
    %c0_i32 = arith.constant 0 : i32
    %c0_i32_0 = arith.constant 0 : i32
    return %arg0, %c0_i32 : i32, i32
  }
}

</mosaic_0001>

<llo_original>
// kernel: tpu_custom_call.1
$region0: #{tpu_custom_call.1}
  #allocation0 [shape = 'u32[]', space=smem, size = 0x4, offset = 0x4, fixed_abs, tag = 'smem constant byte address 0x4 - core index']
  #allocation1 [shape = 'u32[144,128]{1,0:T(1,128)}', space=vmem, size = 0x12000, scoped, tag = 'internal scratch']
  %s0 = inlined_call_operand.hbm [shape: f32[2], index: 0, kind: input, shape index: {}]
  %s1 = inlined_call_operand.hbm [shape: f32[32,200], index: 1, kind: input, shape index: {}]
  %s2 = inlined_call_operand.hbm [shape: f32[200,128], index: 2, kind: input, shape index: {}]
  %s3 = inlined_call_operand.vmem [shape: f32[1,128], index: 3, kind: input, shape index: {}]
  %s4 = inlined_call_operand.hbm [shape: f32[128,128], index: 4, kind: input, shape index: {}]
  %s5 = inlined_call_operand.vmem [shape: f32[1,128], index: 5, kind: input, shape index: {}]
  %s6 = inlined_call_operand.hbm [shape: f32[128,128], index: 6, kind: input, shape index: {}]
  %s7 = inlined_call_operand.vmem [shape: f32[1,128], index: 7, kind: input, shape index: {}]
  %s8 = inlined_call_operand.hbm [shape: f32[32,128], index: 8, kind: output, shape index: {}]
  %s9 = sld [smem:[#allocation0]]
  $region85: #{tpu_custom_call.1} parent=0
    _
  %s11 = ssub.s32 1, %s9
  %s12 = scalar_select 0, %s11, %s9
  $region1: #{tpu_custom_call.1} parent=0
    #allocation2 [shape = 'u8[512]{0}', space=smem, size = 0x200, scoped, tag = 'input window, operand 0, single buffered']
    #allocation3 [shape = 's32[2]{0}', space=sflag, size = 0x8, scoped, tag = 'scoped memory for tpu_custom_call.1']
    #allocation4 [shape = 's32[2]{0}', space=sflag, size = 0x8, scoped, tag = 'scoped memory for tpu_custom_call.1']
    #allocation5 [shape = 's32[2]{0}', space=sflag, size = 0x8, scoped, tag = 'scoped memory for tpu_custom_call.1']
    #allocation6 [shape = 'u8[32768]{0}', space=vmem, size = 0x8000, scoped, tag = 'input window, operand 1']
    #allocation7 [shape = 'u8[102400]{0}', space=vmem, size = 0x19000, scoped, tag = 'input window, operand 2, single buffered']
    #allocation8 [shape = 's32[1]{0}', space=sflag, size = 0x4, scoped, tag = 'scoped memory for tpu_custom_call.1']
    #allocation9 [shape = 'u8[65536]{0}', space=vmem, size = 0x10000, scoped, tag = 'input window, operand 4, single buffered']
    #allocation10 [shape = 'u8[65536]{0}', space=vmem, size = 0x10000, scoped, tag = 'input window, operand 6, single buffered']
    #allocation11 [shape = 's32[1]{0}', space=sflag, size = 0x4, scoped, tag = 'scoped memory for tpu_custom_call.1']
    #allocation12 [shape = 'u8[16384]{0}', space=vmem, size = 0x4000, scoped, tag = 'output window, operand 0']
    %13 = vsyncpa [#allocation5], 0
    %14 = vsyncpa [#allocation3], 0
    %s15 = scalar_lea.sflag [#allocation3], 1
    %16 = vsyncpa %s15, 0
    %17 = vsyncpa [#allocation8], 0
    %18 = vsyncpa [#allocation11], 0
    %19 = vsyncpa [#allocation4], 0
    %s20 = scalar_lea.sflag [#allocation4], 1
    %21 = vsyncpa %s20, 0
    loop: start=0, step=1, limit=4
    $region2: #{tpu_custom_call.1} parent=1 // loop_pre_header
      _
    $region3: #{tpu_custom_call.1} parent=1 // loop_header
      %s23 = sphi 0, %s27
      %p24 = scmp.ge.s32.totalorder %s23, 4
      %s31 = sphi 0, %s31
      %s33 = sphi 0, %s31
      %s34 = sphi 0, %s33
      %s48 = sphi 0, %s34
      %s54 = sphi 0, %s56
      %s57 = sphi 0, %s54
      %s58 = sphi 0, %s57
      %s74 = sphi 0, %s58
      %s78 = sphi 0, %s78
      %s80 = sphi 0, %s78
      %s81 = sphi 0, %s80
      %s95 = sphi 0, %s81
      %s99 = sphi 0, %s99
      %s101 = sphi 0, %s99
      %s102 = sphi 0, %s101
      %s116 = sphi 0, %s102
      %s120 = sphi 0, %s120
      %s122 = sphi 0, %s120
      %s123 = sphi 0, %s122
      %s137 = sphi 0, %s123
      %s141 = sphi 0, %s141
      %s143 = sphi 0, %s141
      %s144 = sphi 0, %s143
      %s158 = sphi 0, %s144
      %s162 = sphi 0, %s162
      %s164 = sphi 0, %s162
      %s165 = sphi 0, %s164
      %s179 = sphi 0, %s165
      %s183 = sphi 0, %s183
      %s185 = sphi 0, %s183
      %s186 = sphi 0, %s185
      %s200 = sphi 0, %s186
      %s206 = sphi 0, %s208
      %s209 = sphi 0, %s206
      %s210 = sphi 0, %s209
      %s226 = sphi 0, %s210
    $region4: #{tpu_custom_call.1} parent=1 // loop_header_branch
      %26 = sbr.rel (%p24) target = $region8
    $region5: #{tpu_custom_call.1} parent=1 // loop_body
      %s28 = ssub.s32 %s23, 1
      %s29 = ssub.s32 %s23, 2
      %s30 = sadd.s32 %s23, 1
      %s32 = sadd.s32 %s31, 1
      %p35 = scmp.eq.s32.totalorder %s23, 1
      %p36 = scmp.ne.s32.totalorder %s31, %s33
      %p37 = scmp.eq.s32.totalorder %s23, 0
      %p38 = por %p36, %p37
      %p39 = scmp.ne.s32.totalorder %s31, %s33
      %p40 = scmp.eq.s32.totalorder %s28, 1
      %p41 = por %p39, %p40
      %p42 = scmp.ne.s32.totalorder %s33, %s34
      %p43 = scmp.eq.s32.totalorder %s28, 0
      %p44 = por %p42, %p43
      %p45 = scmp.ne.s32.totalorder %s33, %s34
      %p46 = scmp.eq.s32.totalorder %s29, 1
      %p47 = por %p45, %p46
      %p49 = scmp.ne.s32.totalorder %s34, %s48
      %p50 = scmp.eq.s32.totalorder %s29, 0
      %p51 = por %p49, %p50
      %s52 = ssub.s32 %s23, %s30
      %p53 = scmp.eq.s32.totalorder %s52, 0
      %s55 = sadd.s32 %s54, 1
      %s56 = scalar_select %p53, %s54, %s55
      %p59 = pneg %p53
      %p60 = scmp.eq.s32.totalorder %s23, 1
      %p61 = por %p59, %p60
      %p62 = scmp.ne.s32.totalorder %s54, %s57
      %p63 = scmp.eq.s32.totalorder %s23, 0
      %p64 = por %p62, %p63
      %p65 = scmp.ne.s32.totalorder %s54, %s57
      %p66 = scmp.eq.s32.totalorder %s28, 1
      %p67 = por %p65, %p66
      %p68 = scmp.ne.s32.totalorder %s57, %s58
      %p69 = scmp.eq.s32.totalorder %s28, 0
      %p70 = por %p68, %p69
      %p71 = scmp.ne.s32.totalorder %s57, %s58
      %p72 = scmp.eq.s32.totalorder %s29, 1
      %p73 = por %p71, %p72
      %p75 = scmp.ne.s32.totalorder %s58, %s74
      %p76 = scmp.eq.s32.totalorder %s29, 0
      %p77 = por %p75, %p76
      %s79 = sadd.s32 %s78, 1
      %p82 = scmp.eq.s32.totalorder %s23, 1
      %p83 = scmp.ne.s32.totalorder %s78, %s80
      %p84 = scmp.eq.s32.totalorder %s23, 0
      %p85 = por %p83, %p84
      %p86 = scmp.ne.s32.totalorder %s78, %s80
      %p87 = scmp.eq.s32.totalorder %s28, 1
      %p88 = por %p86, %p87
      %p89 = scmp.ne.s32.totalorder %s80, %s81
      %p90 = scmp.eq.s32.totalorder %s28, 0
      %p91 = por %p89, %p90
      %p92 = scmp.ne.s32.totalorder %s80, %s81
      %p93 = scmp.eq.s32.totalorder %s29, 1
      %p94 = por %p92, %p93
      %p96 = scmp.ne.s32.totalorder %s81, %s95
      %p97 = scmp.eq.s32.totalorder %s29, 0
      %p98 = por %p96, %p97
      %s100 = sadd.s32 %s99, 1
      %p103 = scmp.eq.s32.totalorder %s23, 1
      %p104 = scmp.ne.s32.totalorder %s99, %s101
      %p105 = scmp.eq.s32.totalorder %s23, 0
      %p106 = por %p104, %p105
      %p107 = scmp.ne.s32.totalorder %s99, %s101
      %p108 = scmp.eq.s32.totalorder %s28, 1
      %p109 = por %p107, %p108
      %p110 = scmp.ne.s32.totalorder %s101, %s102
      %p111 = scmp.eq.s32.totalorder %s28, 0
      %p112 = por %p110, %p111
      %p113 = scmp.ne.s32.totalorder %s101, %s102
      %p114 = scmp.eq.s32.totalorder %s29, 1
      %p115 = por %p113, %p114
      %p117 = scmp.ne.s32.totalorder %s102, %s116
      %p118 = scmp.eq.s32.totalorder %s29, 0
      %p119 = por %p117, %p118
      %s121 = sadd.s32 %s120, 1
      %p124 = scmp.eq.s32.totalorder %s23, 1
      %p125 = scmp.ne.s32.totalorder %s120, %s122
      %p126 = scmp.eq.s32.totalorder %s23, 0
      %p127 = por %p125, %p126
      %p128 = scmp.ne.s32.totalorder %s120, %s122
      %p129 = scmp.eq.s32.totalorder %s28, 1
      %p130 = por %p128, %p129
      %p131 = scmp.ne.s32.totalorder %s122, %s123
      %p132 = scmp.eq.s32.totalorder %s28, 0
      %p133 = por %p131, %p132
      %p134 = scmp.ne.s32.totalorder %s122, %s123
      %p135 = scmp.eq.s32.totalorder %s29, 1
      %p136 = por %p134, %p135
      %p138 = scmp.ne.s32.totalorder %s123, %s137
      %p139 = scmp.eq.s32.totalorder %s29, 0
      %p140 = por %p138, %p139
      %s142 = sadd.s32 %s141, 1
      %p145 = scmp.eq.s32.totalorder %s23, 1
      %p146 = scmp.ne.s32.totalorder %s141, %s143
      %p147 = scmp.eq.s32.totalorder %s23, 0
      %p148 = por %p146, %p147
      %p149 = scmp.ne.s32.totalorder %s141, %s143
      %p150 = scmp.eq.s32.totalorder %s28, 1
      %p151 = por %p149, %p150
      %p152 = scmp.ne.s32.totalorder %s143, %s144
      %p153 = scmp.eq.s32.totalorder %s28, 0
      %p154 = por %p152, %p153
      %p155 = scmp.ne.s32.totalorder %s143, %s144
      %p156 = scmp.eq.s32.totalorder %s29, 1
      %p157 = por %p155, %p156
      %p159 = scmp.ne.s32.totalorder %s144, %s158
      %p160 = scmp.eq.s32.totalorder %s29, 0
      %p161 = por %p159, %p160
      %s163 = sadd.s32 %s162, 1
      %p166 = scmp.eq.s32.totalorder %s23, 1
      %p167 = scmp.ne.s32.totalorder %s162, %s164
      %p168 = scmp.eq.s32.totalorder %s23, 0
      %p169 = por %p167, %p168
      %p170 = scmp.ne.s32.totalorder %s162, %s164
      %p171 = scmp.eq.s32.totalorder %s28, 1
      %p172 = por %p170, %p171
      %p173 = scmp.ne.s32.totalorder %s164, %s165
      %p174 = scmp.eq.s32.totalorder %s28, 0
      %p175 = por %p173, %p174
      %p176 = scmp.ne.s32.totalorder %s164, %s165
      %p177 = scmp.eq.s32.totalorder %s29, 1
      %p178 = por %p176, %p177
      %p180 = scmp.ne.s32.totalorder %s165, %s179
      %p181 = scmp.eq.s32.totalorder %s29, 0
      %p182 = por %p180, %p181
      %s184 = sadd.s32 %s183, 1
      %p187 = scmp.eq.s32.totalorder %s23, 1
      %p188 = scmp.ne.s32.totalorder %s183, %s185
      %p189 = scmp.eq.s32.totalorder %s23, 0
      %p190 = por %p188, %p189
      %p191 = scmp.ne.s32.totalorder %s183, %s185
      %p192 = scmp.eq.s32.totalorder %s28, 1
      %p193 = por %p191, %p192
      %p194 = scmp.ne.s32.totalorder %s185, %s186
      %p195 = scmp.eq.s32.totalorder %s28, 0
      %p196 = por %p194, %p195
      %p197 = scmp.ne.s32.totalorder %s185, %s186
      %p198 = scmp.eq.s32.totalorder %s29, 1
      %p199 = por %p197, %p198
      %p201 = scmp.ne.s32.totalorder %s186, %s200
      %p202 = scmp.eq.s32.totalorder %s29, 0
      %p203 = por %p201, %p202
      %s204 = ssub.s32 %s23, %s30
      %p205 = scmp.eq.s32.totalorder %s204, 0
      %s207 = sadd.s32 %s206, 1
      %s208 = scalar_select %p205, %s206, %s207
      %p211 = pneg %p205
      %p212 = scmp.eq.s32.totalorder %s23, 1
      %p213 = por %p211, %p212
      %p214 = scmp.ne.s32.totalorder %s206, %s209
      %p215 = scmp.eq.s32.totalorder %s23, 0
      %p216 = por %p214, %p215
      %p217 = scmp.ne.s32.totalorder %s206, %s209
      %p218 = scmp.eq.s32.totalorder %s28, 1
      %p219 = por %p217, %p218
      %p220 = scmp.ne.s32.totalorder %s209, %s210
      %p221 = scmp.eq.s32.totalorder %s28, 0
      %p222 = por %p220, %p221
      %p223 = scmp.ne.s32.totalorder %s209, %s210
      %p224 = scmp.eq.s32.totalorder %s29, 1
      %p225 = por %p223, %p224
      %p227 = scmp.ne.s32.totalorder %s210, %s226
      %p228 = scmp.eq.s32.totalorder %s29, 0
      %p229 = por %p227, %p228
      %p230 = scmp.le.s32.totalorder 1, %s23
      %p231 = scmp.lt.s32.totalorder %s23, 3
      %p232 = pnand %p230, %p231
      %p233 = pneg %p232
      // Predicated region
      $region9: #{tpu_custom_call.1} parent=5 // pred_check
        _
      $region10: #{tpu_custom_call.1} parent=5 // pred_check_branch
        %235 = sbr.rel (%p232) target = $region12
      $region11: #{tpu_custom_call.1} parent=5 // pred_region
        %s236 = ssub.s32 %s23, 1
        // Predicated region
        $region13: #{tpu_custom_call.1} parent=11 // pred_check
          %p237 = pneg %p44
        $region14: #{tpu_custom_call.1} parent=11 // pred_check_branch
          %239 = sbr.rel (%p237) target = $region16
        $region15: #{tpu_custom_call.1} parent=11 // pred_region
          %s241 = ssub.s32 16, 16
          %242 = vsyncadd [#allocation5], %s241
          %245 = dma.hbm_to_smem %s0, 16, [#allocation2], [#allocation5]
        $region16: #{tpu_custom_call.1} parent=11 // pred_fallthru
          _
        // Predicated region
        $region17: #{tpu_custom_call.1} parent=11 // pred_check
          %p246 = pneg %p91
        $region18: #{tpu_custom_call.1} parent=11 // pred_check_branch
          %248 = sbr.rel (%p246) target = $region20
        $region19: #{tpu_custom_call.1} parent=11 // pred_region
          %s250 = ssub.s32 3200, 3200
          %251 = vsyncadd [#allocation8], %s250
          %s252 = sshll.u32 [#allocation7], 4
          %s253 = int_to_ptr.vmem [resolvable:$true] %s252
          %258 = dma.hbm_to_vmem [thread:$0]  %s2, 3200, %s253, [#allocation8], 128, 128, 8
        $region20: #{tpu_custom_call.1} parent=11 // pred_fallthru
          _
        // Predicated region
        $region21: #{tpu_custom_call.1} parent=11 // pred_check
          %p259 = pneg %p112
        $region22: #{tpu_custom_call.1} parent=11 // pred_check_branch
          %261 = sbr.rel (%p259) target = $region24
        $region23: #{tpu_custom_call.1} parent=11 // pred_region
          _
        $region24: #{tpu_custom_call.1} parent=11 // pred_fallthru
          _
        // Predicated region
        $region25: #{tpu_custom_call.1} parent=11 // pred_check
          %p262 = pneg %p133
        $region26: #{tpu_custom_call.1} parent=11 // pred_check_branch
          %264 = sbr.rel (%p262) target = $region28
        $region27: #{tpu_custom_call.1} parent=11 // pred_region
          %s266 = ssub.s32 2048, 2048
          %267 = vsyncadd [#allocation8], %s266
          %s268 = sshll.u32 [#allocation9], 4
          %s269 = int_to_ptr.vmem [resolvable:$true] %s268
          %274 = dma.hbm_to_vmem [thread:$0]  %s4, 2048, %s269, [#allocation8], 128, 128, 8
        $region28: #{tpu_custom_call.1} parent=11 // pred_fallthru
          _
        // Predicated region
        $region29: #{tpu_custom_call.1} parent=11 // pred_check
          %p275 = pneg %p154
        $region30: #{tpu_custom_call.1} parent=11 // pred_check_branch
          %277 = sbr.rel (%p275) target = $region32
        $region31: #{tpu_custom_call.1} parent=11 // pred_region
          _
        $region32: #{tpu_custom_call.1} parent=11 // pred_fallthru
          _
        // Predicated region
        $region33: #{tpu_custom_call.1} parent=11 // pred_check
          %p278 = pneg %p175
        $region34: #{tpu_custom_call.1} parent=11 // pred_check_branch
          %280 = sbr.rel (%p278) target = $region36
        $region35: #{tpu_custom_call.1} parent=11 // pred_region
          %s282 = ssub.s32 2048, 2048
          %283 = vsyncadd [#allocation11], %s282
          %s284 = sshll.u32 [#allocation10], 4
          %s285 = int_to_ptr.vmem [resolvable:$true] %s284
          %290 = dma.hbm_to_vmem [thread:$0]  %s6, 2048, %s285, [#allocation11], 128, 128, 8
        $region36: #{tpu_custom_call.1} parent=11 // pred_fallthru
          _
        // Predicated region
        $region37: #{tpu_custom_call.1} parent=11 // pred_check
          %p291 = pneg %p196
        $region38: #{tpu_custom_call.1} parent=11 // pred_check_branch
          %293 = sbr.rel (%p291) target = $region40
        $region39: #{tpu_custom_call.1} parent=11 // pred_region
          _
        $region40: #{tpu_custom_call.1} parent=11 // pred_fallthru
          _
      $region12: #{tpu_custom_call.1} parent=5 // pred_fallthru
        _
      %p294 = scmp.lt.s32.totalorder %s23, 2
      // Predicated region
      $region41: #{tpu_custom_call.1} parent=5 // pred_check
        %p295 = pneg %p294
      $region42: #{tpu_custom_call.1} parent=5 // pred_check_branch
        %297 = sbr.rel (%p295) target = $region44
      $region43: #{tpu_custom_call.1} parent=5 // pred_region
        // Predicated region
        $region45: #{tpu_custom_call.1} parent=43 // pred_check
          %p298 = pneg %p64
        $region46: #{tpu_custom_call.1} parent=43 // pred_check_branch
          %300 = sbr.rel (%p298) target = $region48
        $region47: #{tpu_custom_call.1} parent=43 // pred_region
          %s301 = sand.u32 %s54, 1
          %s302 = scalar_lea.sflag [#allocation3], %s301
          %s303 = sand.u32 %s54, 1
          %s304 = smul.addr %s303, 32
          %s305 = scalar_lea.vmem [#allocation6], %s304
          %s306 = smul.u32 2, %s23
          %s308 = ssub.s32 512, 512
          %309 = vsyncadd %s302, %s308
          %s310 = smul.addr %s306, 2
          %s311 = smul.addr %s310, 128
          %s312 = scalar_lea.hbm %s1, %s311
          %s313 = sshll.u32 %s305, 4
          %s314 = int_to_ptr.vmem [resolvable:$true] %s313
          %319 = dma.hbm_to_vmem [thread:$0]  %s312, 512, %s314, %s302, 256, 256, 16
        $region48: #{tpu_custom_call.1} parent=43 // pred_fallthru
          _
      $region44: #{tpu_custom_call.1} parent=5 // pred_fallthru
        _
      %p320 = scmp.le.s32.totalorder 1, %s23
      %p321 = scmp.lt.s32.totalorder %s23, 3
      %p322 = pnand %p320, %p321
      %p323 = pneg %p322
      // Predicated region
      $region49: #{tpu_custom_call.1} parent=5 // pred_check
        _
      $region50: #{tpu_custom_call.1} parent=5 // pred_check_branch
        %325 = sbr.rel (%p322) target = $region52
      $region51: #{tpu_custom_call.1} parent=5 // pred_region
        %s326 = ssub.s32 %s23, 1
        // Predicated region
        $region53: #{tpu_custom_call.1} parent=51 // pred_check
          %p327 = pneg %p44
        $region54: #{tpu_custom_call.1} parent=51 // pred_check_branch
          %329 = sbr.rel (%p327) target = $region56
        $region55: #{tpu_custom_call.1} parent=51 // pred_region
          %330 = dma.done [#allocation5], 16
        $region56: #{tpu_custom_call.1} parent=51 // pred_fallthru
          _
        %s331 = sand.u32 %s57, 1
        %s332 = scalar_lea.sflag [#allocation3], %s331
        %s333 = sand.u32 %s57, 1
        %s334 = smul.addr %s333, 32
        %s335 = scalar_lea.vmem [#allocation6], %s334
        // Predicated region
        $region57: #{tpu_custom_call.1} parent=51 // pred_check
          %p336 = pneg %p70
        $region58: #{tpu_custom_call.1} parent=51 // pred_check_branch
          %338 = sbr.rel (%p336) target = $region60
        $region59: #{tpu_custom_call.1} parent=51 // pred_region
          %339 = dma.done %s332, 512
        $region60: #{tpu_custom_call.1} parent=51 // pred_fallthru
          _
        // Predicated region
        $region61: #{tpu_custom_call.1} parent=51 // pred_check
          %p340 = pneg %p91
        $region62: #{tpu_custom_call.1} parent=51 // pred_check_branch
          %342 = sbr.rel (%p340) target = $region64
        $region63: #{tpu_custom_call.1} parent=51 // pred_region
          %343 = dma.done [#allocation8], 3200
        $region64: #{tpu_custom_call.1} parent=51 // pred_fallthru
          _
        // Predicated region
        $region65: #{tpu_custom_call.1} parent=51 // pred_check
          %p344 = pneg %p133
        $region66: #{tpu_custom_call.1} parent=51 // pred_check_branch
          %346 = sbr.rel (%p344) target = $region68
        $region67: #{tpu_custom_call.1} parent=51 // pred_region
          %347 = dma.done [#allocation8], 2048
        $region68: #{tpu_custom_call.1} parent=51 // pred_fallthru
          _
        // Predicated region
        $region69: #{tpu_custom_call.1} parent=51 // pred_check
          %p348 = pneg %p175
        $region70: #{tpu_custom_call.1} parent=51 // pred_check_branch
          %350 = sbr.rel (%p348) target = $region72
        $region71: #{tpu_custom_call.1} parent=51 // pred_region
          %351 = dma.done [#allocation11], 2048
        $region72: #{tpu_custom_call.1} parent=51 // pred_fallthru
          _
        %352 = sfence
        %p353 = pneg %p44
        %p354 = pneg %p41
        %s355 = sand.u32 %s57, 1
        %s356 = scalar_lea.sflag [#allocation3], %s355
        %s357 = sand.u32 %s57, 1
        %s358 = smul.addr %s357, 32
        %s359 = scalar_lea.vmem [#allocation6], %s358
        %p360 = pneg %p70
        %p361 = pneg %p67
        %p362 = pneg %p91
        %p363 = pneg %p88
        %p364 = pneg %p112
        %p365 = pneg %p109
        %p366 = pneg %p133
        %p367 = pneg %p130
        %p368 = pneg %p154
        %p369 = pneg %p151
        %p370 = pneg %p175
        %p371 = pneg %p172
        %p372 = pneg %p196
        %p373 = pneg %p193
        %p374 = pneg %p222
        %p375 = pneg %p219
        %s376 = sand.u32 %s209, 1
        %s377 = scalar_lea.sflag [#allocation4], %s376
        %s378 = sand.u32 %s209, 1
        %s379 = smul.addr %s378, 16
        %s380 = scalar_lea.vmem [#allocation12], %s379
        %s381 = smul.u32 2, %s28
        %s382 = smul.u32 2, %s28
        %s383 = sld [smem:[#allocation2]]
        %s384 = sld [smem:[#allocation2 + $0x1]]
        %v385 = vld [vmem:[%s335] sm:$0xff]
        %v386 = vld [vmem:[%s335 + $0x8] sm:$0xff]
        %v387 = vld [vmem:[%s335 + $0x10] sm:$0xff]
        %v388 = vld [vmem:[%s335 + $0x18] sm:$0xff]
        %v389 = vld [vmem:[#allocation7] sm:$0xff]
        %v390 = vld [vmem:[#allocation7 + $0x8] sm:$0xff]
        %v391 = vld [vmem:[#allocation7 + $0x10] sm:$0xff]
        %v392 = vld [vmem:[#allocation7 + $0x18] sm:$0xff]
        %v393 = vld [vmem:[#allocation7 + $0x20] sm:$0xff]
        %v394 = vld [vmem:[#allocation7 + $0x28] sm:$0xff]
        %v395 = vld [vmem:[#allocation7 + $0x30] sm:$0xff]
        %v396 = vld [vmem:[#allocation7 + $0x38] sm:$0xff]
        %v397 = vld [vmem:[#allocation7 + $0x40] sm:$0xff]
        %v398 = vld [vmem:[#allocation7 + $0x48] sm:$0xff]
        %v399 = vld [vmem:[#allocation7 + $0x50] sm:$0xff]
        %v400 = vld [vmem:[#allocation7 + $0x58] sm:$0xff]
        %v401 = vld [vmem:[#allocation7 + $0x60] sm:$0xff]
        %v402 = vld [vmem:[#allocation7 + $0x68] sm:$0xff]
        %v403 = vld [vmem:[#allocation7 + $0x70] sm:$0xff]
        %v404 = vld [vmem:[#allocation7 + $0x78] sm:$0xff]
        %v405 = vld [vmem:[#allocation7 + $0x80] sm:$0xff]
        %v406 = vld [vmem:[#allocation7 + $0x88] sm:$0xff]
        %v407 = vld [vmem:[#allocation7 + $0x90] sm:$0xff]
        %v408 = vld [vmem:[#allocation7 + $0x98] sm:$0xff]
        %v409 = vld [vmem:[#allocation7 + $0xa0] sm:$0xff]
        %v410 = vld [vmem:[#allocation7 + $0xa8] sm:$0xff]
        %v411 = vld [vmem:[#allocation7 + $0xb0] sm:$0xff]
        %v412 = vld [vmem:[#allocation7 + $0xb8] sm:$0xff]
        %v413 = vld [vmem:[#allocation7 + $0xc0] sm:$0xff]
        %v414 = vld [vmem:[%s3] sm:$0x1]
        %v416 = vlaneseq
        %v417 = vshrl.u32 %v416, 7
        %v418 = vsub.s32 0, %v417
        %v419 = vrot.slane %v414, %v418
        %vm421 = vcmask 588800
        %v423 = vsel %vm421, %v386, 0
        %v426 = vsel %vm421, %v388, 0
        %428 = vmatprep.subr.mxu0 0.0
        %429 = vmatpush1.msra.mxu0 %v404
        %430 = vmatprep.subr.mxu0 0.0
        %431 = vmatpush1.msra.mxu0 %v403
        %432 = vmatprep.subr.mxu0 0.0
        %433 = vmatpush1.msra.mxu0 %v402
        %434 = vmatprep.subr.mxu0 0.0
        %435 = vmatpush1.msra.mxu0 %v401
        %436 = vmatprep.subr.mxu0 0.0
        %437 = vmatpush1.msra.mxu0 %v400
        %438 = vmatprep.subr.mxu0 0.0
        %439 = vmatpush1.msra.mxu0 %v399
        %440 = vmatprep.subr.mxu0 0.0
        %441 = vmatpush1.msra.mxu0 %v398
        %442 = vmatprep.subr.mxu0 0.0
        %443 = vmatpush1.msra.mxu0 %v397
        %444 = vmatprep.subr.mxu0 0.0
        %445 = vmatpush1.msra.mxu0 %v396
        %446 = vmatprep.subr.mxu0 0.0
        %447 = vmatpush1.msra.mxu0 %v395
        %448 = vmatprep.subr.mxu0 0.0
        %449 = vmatpush1.msra.mxu0 %v394
        %450 = vmatprep.subr.mxu0 0.0
        %451 = vmatpush1.msra.mxu0 %v393
        %452 = vmatprep.subr.mxu0 0.0
        %453 = vmatpush1.msra.mxu0 %v392
        %454 = vmatprep.subr.mxu0 0.0
        %455 = vmatpush1.msra.mxu0 %v391
        %456 = vmatprep.subr.mxu0 0.0
        %457 = vmatpush1.msra.mxu0 %v390
        %458 = vmatprep.subr.mxu0 0.0
        %459 = vmatpush1.msra.mxu0 %v389
        %460 = vmatprep.subr.mxu0 0.0
        %461 = vmatpush2.msra.mxu0 0.0
        %462 = vmatprep.subr.mxu0 0.0
        %463 = vmatpush2.msra.mxu0 0.0
        %464 = vmatprep.subr.mxu0 0.0
        %465 = vmatpush2.msra.mxu0 0.0
        %466 = vmatprep.subr.mxu0 0.0
        %467 = vmatpush2.msra.mxu0 0.0
        %468 = vmatprep.subr.mxu0 0.0
        %469 = vmatpush2.msra.mxu0 0.0
        %470 = vmatprep.subr.mxu0 0.0
        %471 = vmatpush2.msra.mxu0 0.0
        %472 = vmatprep.subr.mxu0 0.0
        %473 = vmatpush2.msra.mxu0 0.0
        %474 = vmatprep.subr.mxu0 0.0
        %475 = vmatpush2.msra.mxu0 %v413
        %476 = vmatprep.subr.mxu0 0.0
        %477 = vmatpush2.msra.mxu0 %v412
        %478 = vmatprep.subr.mxu0 0.0
        %479 = vmatpush2.msra.mxu0 %v411
        %480 = vmatprep.subr.mxu0 0.0
        %481 = vmatpush2.msra.mxu0 %v410
        %482 = vmatprep.subr.mxu0 0.0
        %483 = vmatpush2.msra.mxu0 %v409
        %484 = vmatprep.subr.mxu0 0.0
        %485 = vmatpush2.msra.mxu0 %v408
        %486 = vmatprep.subr.mxu0 0.0
        %487 = vmatpush2.msra.mxu0 %v407
        %488 = vmatprep.subr.mxu0 0.0
        %489 = vmatpush2.msra.mxu0 %v406
        %490 = vmatprep.subr.mxu0 0.0
        %491 = vmatpush2.msra.mxu0 %v405
        %492 = vmatprep.mubr.f32.mxu0 %v423
        %493 = vmatmul.mubr.f32.gmra.mxu0 %v385
        %v494 = vpop.f32.mrf.mxu0
        %v495 = vadd.f32 %v419, %v494
        %v496 = vpop.f32.mrf.mxu0
        %497 = vmatprep.mubr.f32.mxu0 %v426
        %498 = vmatmul.mubr.f32.gmra.mxu0 %v387
        %v499 = vpop.f32.mrf.mxu0
        %v500 = vadd.f32 %v419, %v499
        %v501 = vpop.f32.mrf.mxu0
        %502 = vdwg.mxu0
        %vm503 = vcmp.gt.f32.partialorder %v495, 0.0
        %vm504 = vcmp.gt.f32.partialorder %v500, 0.0
        %v505 = vstv %s383
        %v506 = vmul.f32 %v505, %v495
        %v507 = vmul.f32 %v505, %v500
        %v508 = vsel %vm503, %v495, %v506
        %v509 = vsel %vm504, %v500, %v507
        %v510 = vld [vmem:[#allocation9] sm:$0xff]
        %v511 = vld [vmem:[#allocation9 + $0x8] sm:$0xff]
        %v512 = vld [vmem:[#allocation9 + $0x10] sm:$0xff]
        %v513 = vld [vmem:[#allocation9 + $0x18] sm:$0xff]
        %v514 = vld [vmem:[#allocation9 + $0x20] sm:$0xff]
        %v515 = vld [vmem:[#allocation9 + $0x28] sm:$0xff]
        %v516 = vld [vmem:[#allocation9 + $0x30] sm:$0xff]
        %v517 = vld [vmem:[#allocation9 + $0x38] sm:$0xff]
        %v518 = vld [vmem:[#allocation9 + $0x40] sm:$0xff]
        %v519 = vld [vmem:[#allocation9 + $0x48] sm:$0xff]
        %v520 = vld [vmem:[#allocation9 + $0x50] sm:$0xff]
        %v521 = vld [vmem:[#allocation9 + $0x58] sm:$0xff]
        %v522 = vld [vmem:[#allocation9 + $0x60] sm:$0xff]
        %v523 = vld [vmem:[#allocation9 + $0x68] sm:$0xff]
        %v524 = vld [vmem:[#allocation9 + $0x70] sm:$0xff]
        %v525 = vld [vmem:[#allocation9 + $0x78] sm:$0xff]
        %v526 = vld [vmem:[%s5] sm:$0x1]
        %v528 = vlaneseq
        %v529 = vshrl.u32 %v528, 7
        %v530 = vsub.s32 0, %v529
        %v531 = vrot.slane %v526, %v530
        %533 = vmatprep.subr.mxu0 0.0
        %534 = vmatpush1.msra.mxu0 %v525
        %535 = vmatprep.subr.mxu0 0.0
        %536 = vmatpush1.msra.mxu0 %v524
        %537 = vmatprep.subr.mxu0 0.0
        %538 = vmatpush1.msra.mxu0 %v523
        %539 = vmatprep.subr.mxu0 0.0
        %540 = vmatpush1.msra.mxu0 %v522
        %541 = vmatprep.subr.mxu0 0.0
        %542 = vmatpush1.msra.mxu0 %v521
        %543 = vmatprep.subr.mxu0 0.0
        %544 = vmatpush1.msra.mxu0 %v520
        %545 = vmatprep.subr.mxu0 0.0
        %546 = vmatpush1.msra.mxu0 %v519
        %547 = vmatprep.subr.mxu0 0.0
        %548 = vmatpush1.msra.mxu0 %v518
        %549 = vmatprep.subr.mxu0 0.0
        %550 = vmatpush1.msra.mxu0 %v517
        %551 = vmatprep.subr.mxu0 0.0
        %552 = vmatpush1.msra.mxu0 %v516
        %553 = vmatprep.subr.mxu0 0.0
        %554 = vmatpush1.msra.mxu0 %v515
        %555 = vmatprep.subr.mxu0 0.0
        %556 = vmatpush1.msra.mxu0 %v514
        %557 = vmatprep.subr.mxu0 0.0
        %558 = vmatpush1.msra.mxu0 %v513
        %559 = vmatprep.subr.mxu0 0.0
        %560 = vmatpush1.msra.mxu0 %v512
        %561 = vmatprep.subr.mxu0 0.0
        %562 = vmatpush1.msra.mxu0 %v511
        %563 = vmatprep.subr.mxu0 0.0
        %564 = vmatpush1.msra.mxu0 %v510
        %565 = vmatprep.subr.mxu0 0.0
        %566 = vmatpush2.msra.mxu0 0.0
        %567 = vmatprep.subr.mxu0 0.0
        %568 = vmatpush2.msra.mxu0 0.0
        %569 = vmatprep.subr.mxu0 0.0
        %570 = vmatpush2.msra.mxu0 0.0
        %571 = vmatprep.subr.mxu0 0.0
        %572 = vmatpush2.msra.mxu0 0.0
        %573 = vmatprep.subr.mxu0 0.0
        %574 = vmatpush2.msra.mxu0 0.0
        %575 = vmatprep.subr.mxu0 0.0
        %576 = vmatpush2.msra.mxu0 0.0
        %577 = vmatprep.subr.mxu0 0.0
        %578 = vmatpush2.msra.mxu0 0.0
        %579 = vmatprep.subr.mxu0 0.0
        %580 = vmatpush2.msra.mxu0 0.0
        %581 = vmatprep.subr.mxu0 0.0
        %582 = vmatpush2.msra.mxu0 0.0
        %583 = vmatprep.subr.mxu0 0.0
        %584 = vmatpush2.msra.mxu0 0.0
        %585 = vmatprep.subr.mxu0 0.0
        %586 = vmatpush2.msra.mxu0 0.0
        %587 = vmatprep.subr.mxu0 0.0
        %588 = vmatpush2.msra.mxu0 0.0
        %589 = vmatprep.subr.mxu0 0.0
        %590 = vmatpush2.msra.mxu0 0.0
        %591 = vmatprep.subr.mxu0 0.0
        %592 = vmatpush2.msra.mxu0 0.0
        %593 = vmatprep.subr.mxu0 0.0
        %594 = vmatpush2.msra.mxu0 0.0
        %595 = vmatprep.subr.mxu0 0.0
        %596 = vmatpush2.msra.mxu0 0.0
        %597 = vmatprep.mubr.f32.mxu0 0.0
        %598 = vmatmul.mubr.f32.gmra.mxu0 %v508
        %v599 = vpop.f32.mrf.mxu0
        %v600 = vadd.f32 %v531, %v599
        %v601 = vpop.f32.mrf.mxu0
        %602 = vmatprep.mubr.f32.mxu0 0.0
        %603 = vmatmul.mubr.f32.gmra.mxu0 %v509
        %v604 = vpop.f32.mrf.mxu0
        %v605 = vadd.f32 %v531, %v604
        %v606 = vpop.f32.mrf.mxu0
        %607 = vdwg.mxu0
        %vm608 = vcmp.gt.f32.partialorder %v600, 0.0
        %vm609 = vcmp.gt.f32.partialorder %v605, 0.0
        %v610 = vstv %s384
        %v611 = vmul.f32 %v610, %v600
        %v612 = vmul.f32 %v610, %v605
        %v613 = vsel %vm608, %v600, %v611
        %v614 = vsel %vm609, %v605, %v612
        %v615 = vld [vmem:[#allocation10] sm:$0xff]
        %v616 = vld [vmem:[#allocation10 + $0x8] sm:$0xff]
        %v617 = vld [vmem:[#allocation10 + $0x10] sm:$0xff]
        %v618 = vld [vmem:[#allocation10 + $0x18] sm:$0xff]
        %v619 = vld [vmem:[#allocation10 + $0x20] sm:$0xff]
        %v620 = vld [vmem:[#allocation10 + $0x28] sm:$0xff]
        %v621 = vld [vmem:[#allocation10 + $0x30] sm:$0xff]
        %v622 = vld [vmem:[#allocation10 + $0x38] sm:$0xff]
        %v623 = vld [vmem:[#allocation10 + $0x40] sm:$0xff]
        %v624 = vld [vmem:[#allocation10 + $0x48] sm:$0xff]
        %v625 = vld [vmem:[#allocation10 + $0x50] sm:$0xff]
        %v626 = vld [vmem:[#allocation10 + $0x58] sm:$0xff]
        %v627 = vld [vmem:[#allocation10 + $0x60] sm:$0xff]
        %v628 = vld [vmem:[#allocation10 + $0x68] sm:$0xff]
        %v629 = vld [vmem:[#allocation10 + $0x70] sm:$0xff]
        %v630 = vld [vmem:[#allocation10 + $0x78] sm:$0xff]
        %v631 = vld [vmem:[%s7] sm:$0x1]
        %v633 = vlaneseq
        %v634 = vshrl.u32 %v633, 7
        %v635 = vsub.s32 0, %v634
        %v636 = vrot.slane %v631, %v635
        %638 = vmatprep.subr.mxu0 0.0
        %639 = vmatpush1.msra.mxu0 %v630
        %640 = vmatprep.subr.mxu0 0.0
        %641 = vmatpush1.msra.mxu0 %v629
        %642 = vmatprep.subr.mxu0 0.0
        %643 = vmatpush1.msra.mxu0 %v628
        %644 = vmatprep.subr.mxu0 0.0
        %645 = vmatpush1.msra.mxu0 %v627
        %646 = vmatprep.subr.mxu0 0.0
        %647 = vmatpush1.msra.mxu0 %v626
        %648 = vmatprep.subr.mxu0 0.0
        %649 = vmatpush1.msra.mxu0 %v625
        %650 = vmatprep.subr.mxu0 0.0
        %651 = vmatpush1.msra.mxu0 %v624
        %652 = vmatprep.subr.mxu0 0.0
        %653 = vmatpush1.msra.mxu0 %v623
        %654 = vmatprep.subr.mxu0 0.0
        %655 = vmatpush1.msra.mxu0 %v622
        %656 = vmatprep.subr.mxu0 0.0
        %657 = vmatpush1.msra.mxu0 %v621
        %658 = vmatprep.subr.mxu0 0.0
        %659 = vmatpush1.msra.mxu0 %v620
        %660 = vmatprep.subr.mxu0 0.0
        %661 = vmatpush1.msra.mxu0 %v619
        %662 = vmatprep.subr.mxu0 0.0
        %663 = vmatpush1.msra.mxu0 %v618
        %664 = vmatprep.subr.mxu0 0.0
        %665 = vmatpush1.msra.mxu0 %v617
        %666 = vmatprep.subr.mxu0 0.0
        %667 = vmatpush1.msra.mxu0 %v616
        %668 = vmatprep.subr.mxu0 0.0
        %669 = vmatpush1.msra.mxu0 %v615
        %670 = vmatprep.subr.mxu0 0.0
        %671 = vmatpush2.msra.mxu0 0.0
        %672 = vmatprep.subr.mxu0 0.0
        %673 = vmatpush2.msra.mxu0 0.0
        %674 = vmatprep.subr.mxu0 0.0
        %675 = vmatpush2.msra.mxu0 0.0
        %676 = vmatprep.subr.mxu0 0.0
        %677 = vmatpush2.msra.mxu0 0.0
        %678 = vmatprep.subr.mxu0 0.0
        %679 = vmatpush2.msra.mxu0 0.0
        %680 = vmatprep.subr.mxu0 0.0
        %681 = vmatpush2.msra.mxu0 0.0
        %682 = vmatprep.subr.mxu0 0.0
        %683 = vmatpush2.msra.mxu0 0.0
        %684 = vmatprep.subr.mxu0 0.0
        %685 = vmatpush2.msra.mxu0 0.0
        %686 = vmatprep.subr.mxu0 0.0
        %687 = vmatpush2.msra.mxu0 0.0
        %688 = vmatprep.subr.mxu0 0.0
        %689 = vmatpush2.msra.mxu0 0.0
        %690 = vmatprep.subr.mxu0 0.0
        %691 = vmatpush2.msra.mxu0 0.0
        %692 = vmatprep.subr.mxu0 0.0
        %693 = vmatpush2.msra.mxu0 0.0
        %694 = vmatprep.subr.mxu0 0.0
        %695 = vmatpush2.msra.mxu0 0.0
        %696 = vmatprep.subr.mxu0 0.0
        %697 = vmatpush2.msra.mxu0 0.0
        %698 = vmatprep.subr.mxu0 0.0
        %699 = vmatpush2.msra.mxu0 0.0
        %700 = vmatprep.subr.mxu0 0.0
        %701 = vmatpush2.msra.mxu0 0.0
        %702 = vmatprep.mubr.f32.mxu0 0.0
        %703 = vmatmul.mubr.f32.gmra.mxu0 %v613
        %v704 = vpop.f32.mrf.mxu0
        %v705 = vadd.f32 %v636, %v704
        %v706 = vpop.f32.mrf.mxu0
        %707 = vmatprep.mubr.f32.mxu0 0.0
        %708 = vmatmul.mubr.f32.gmra.mxu0 %v614
        %v709 = vpop.f32.mrf.mxu0
        %v710 = vadd.f32 %v636, %v709
        %v711 = vpop.f32.mrf.mxu0
        %712 = vdwg.mxu0
        %v713 = vmul.f32 %v705, %v705
        %v714 = vmul.f32 %v710, %v710
        %715 = vadd.xlane.f32.xlu0 %v713
        %v716 = vpop.xlane.xlu0 %715
        %717 = vadd.xlane.f32.xlu0 %v714
        %v718 = vpop.xlane.xlu0 %717
        %v719 = vmax.f32 %v716, 1e-24
        %v720 = vmax.f32 %v718, 1e-24
        %v721 = vrsqrt.pop %v719
        %v722 = vrsqrt.pop %v720
        %v723 = vmul.f32 %v705, %v721
        %v724 = vmul.f32 %v710, %v722
        %725 = vst [vmem:[%s380] sm:$0xff] %v723
        %726 = vst [vmem:[%s380 + $0x8] sm:$0xff] %v724
        %s727 = sand.u32 %s209, 1
        %s728 = scalar_lea.sflag [#allocation4], %s727
        %s729 = sand.u32 %s209, 1
        %s730 = smul.addr %s729, 16
        %s731 = scalar_lea.vmem [#allocation12], %s730
        // Predicated region
        $region73: #{tpu_custom_call.1} parent=51 // pred_check
          %p732 = pneg %p219
        $region74: #{tpu_custom_call.1} parent=51 // pred_check_branch
          %734 = sbr.rel (%p732) target = $region76
        $region75: #{tpu_custom_call.1} parent=51 // pred_region
          %s735 = smul.u32 2, %s28
          %s737 = ssub.s32 256, 256
          %738 = vsyncadd %s728, %s737
          %s739 = smul.addr %s735, 128
          %s740 = scalar_lea.hbm %s8, %s739
          %s741 = sshll.u32 %s731, 4
          %s742 = int_to_ptr.vmem [resolvable:$true] %s741
          %747 = dma.vmem_to_hbm [thread:$0]  %s742, 256, %s740, %s728, 128, 128, 8
        $region76: #{tpu_custom_call.1} parent=51 // pred_fallthru
          _
      $region52: #{tpu_custom_call.1} parent=5 // pred_fallthru
        _
      %p748 = scmp.le.s32.totalorder 2, %s23
      // Predicated region
      $region77: #{tpu_custom_call.1} parent=5 // pred_check
        %p749 = pneg %p748
      $region78: #{tpu_custom_call.1} parent=5 // pred_check_branch
        %751 = sbr.rel (%p749) target = $region80
      $region79: #{tpu_custom_call.1} parent=5 // pred_region
        %s752 = ssub.s32 %s23, 2
        // Predicated region
        $region81: #{tpu_custom_call.1} parent=79 // pred_check
          %p753 = pneg %p225
        $region82: #{tpu_custom_call.1} parent=79 // pred_check_branch
          %755 = sbr.rel (%p753) target = $region84
        $region83: #{tpu_custom_call.1} parent=79 // pred_region
          %s756 = sand.u32 %s210, 1
          %s757 = scalar_lea.sflag [#allocation4], %s756
          %s758 = sand.u32 %s210, 1
          %s759 = smul.addr %s758, 16
          %s760 = scalar_lea.vmem [#allocation12], %s759
          %761 = dma.done %s757, 256
        $region84: #{tpu_custom_call.1} parent=79 // pred_fallthru
          _
      $region80: #{tpu_custom_call.1} parent=5 // pred_fallthru
        _
    $region6: #{tpu_custom_call.1} parent=1 // loop_footer
      %s27 = sadd.s32 1, %s23
    $region7: #{tpu_custom_call.1} parent=1 // loop_footer_branch
      %22 = sbr.rel target = $region3
    $region8: #{tpu_custom_call.1} parent=1 // loop_exit
      _
    %762 = vsyncpa [#allocation3], 1
    %s763 = scalar_lea.sflag [#allocation3], 1
    %764 = vsyncpa %s763, 1
    %765 = vsyncpa [#allocation8], 1
    %766 = vsyncpa [#allocation11], 1
    %767 = vsyncpa [#allocation4], 1
    %s768 = scalar_lea.sflag [#allocation4], 1
    %769 = vsyncpa %s768, 1
    %770 = vsyncpa [#allocation5], 1
    %s771 = scalar_lea.sflag [#allocation5], 1
    %772 = vsyncpa %s771, 1

// kernel: tpu_custom_call.1
$region0: #{tpu_custom_call.1}
  #allocation0 [shape = 'u32[]', space=smem, size = 0x4, offset = 0x4, fixed_abs, tag = 'smem constant byte address 0x4 - core index']
  #allocation1 [shape = 'u32[144,128]{1,0:T(1,128)}', space=vmem, size = 0x12000, scoped, tag = 'internal scratch']
  %s0 = inlined_call_operand.hbm [shape: f32[2], index: 0, kind: input, shape index: {}]
  %s1 = inlined_call_operand.hbm [shape: f32[32,200], index: 1, kind: input, shape index: {}]
  %s2 = inlined_call_operand.hbm [shape: f32[200,128], index: 2, kind: input, shape index: {}]
  %s3 = inlined_call_operand.vmem [shape: f32[1,128], index: 3, kind: input, shape index: {}]
  %s4 = inlined_call_operand.hbm [shape: f32[128,128], index: 4, kind: input, shape index: {}]
  %s5 = inlined_call_operand.vmem [shape: f32[1,128], index: 5, kind: input, shape index: {}]
  %s6 = inlined_call_operand.hbm [shape: f32[128,128], index: 6, kind: input, shape index: {}]
  %s7 = inlined_call_operand.vmem [shape: f32[1,128], index: 7, kind: input, shape index: {}]
  %s8 = inlined_call_operand.hbm [shape: f32[32,128], index: 8, kind: output, shape index: {}]
  %s9 = sld [smem:[#allocation0]]
  $region85: #{tpu_custom_call.1} parent=0
    _
  %s11 = ssub.s32 1, %s9
  %s12 = scalar_select 0, %s11, %s9
  $region1: #{tpu_custom_call.1} parent=0
    #allocation2 [shape = 'u8[512]{0}', space=smem, size = 0x200, scoped, tag = 'input window, operand 0, single buffered']
    #allocation3 [shape = 's32[2]{0}', space=sflag, size = 0x8, scoped, tag = 'scoped memory for tpu_custom_call.1']
    #allocation4 [shape = 's32[2]{0}', space=sflag, size = 0x8, scoped, tag = 'scoped memory for tpu_custom_call.1']
    #allocation5 [shape = 's32[2]{0}', space=sflag, size = 0x8, scoped, tag = 'scoped memory for tpu_custom_call.1']
    #allocation6 [shape = 'u8[32768]{0}', space=vmem, size = 0x8000, scoped, tag = 'input window, operand 1']
    #allocation7 [shape = 'u8[102400]{0}', space=vmem, size = 0x19000, scoped, tag = 'input window, operand 2, single buffered']
    #allocation8 [shape = 's32[1]{0}', space=sflag, size = 0x4, scoped, tag = 'scoped memory for tpu_custom_call.1']
    #allocation9 [shape = 'u8[65536]{0}', space=vmem, size = 0x10000, scoped, tag = 'input window, operand 4, single buffered']
    #allocation10 [shape = 'u8[65536]{0}', space=vmem, size = 0x10000, scoped, tag = 'input window, operand 6, single buffered']
    #allocation11 [shape = 's32[1]{0}', space=sflag, size = 0x4, scoped, tag = 'scoped memory for tpu_custom_call.1']
    #allocation12 [shape = 'u8[16384]{0}', space=vmem, size = 0x4000, scoped, tag = 'output window, operand 0']
    %13 = vsyncpa [#allocation5], 0
    %14 = vsyncpa [#allocation3], 0
    %s15 = scalar_lea.sflag [#allocation3], 1
    %16 = vsyncpa %s15, 0
    %17 = vsyncpa [#allocation8], 0
    %18 = vsyncpa [#allocation11], 0
    %19 = vsyncpa [#allocation4], 0
    %s20 = scalar_lea.sflag [#allocation4], 1
    %21 = vsyncpa %s20, 0
    loop: start=0, step=1, limit=4
    $region2: #{tpu_custom_call.1} parent=1 // loop_pre_header
      _
    $region3: #{tpu_custom_call.1} parent=1 // loop_header
      %s23 = sphi 0, %s27
      %p24 = scmp.ge.s32.totalorder %s23, 4
      %s31 = sphi 0, %s31
      %s33 = sphi 0, %s31
      %s34 = sphi 0, %s33
      %s48 = sphi 0, %s34
      %s54 = sphi 0, %s56
      %s57 = sphi 0, %s54
      %s58 = sphi 0, %s57
      %s74 = sphi 0, %s58
      %s78 = sphi 0, %s78
      %s80 = sphi 0, %s78
      %s81 = sphi 0, %s80
      %s95 = sphi 0, %s81
      %s99 = sphi 0, %s99
      %s101 = sphi 0, %s99
      %s102 = sphi 0, %s101
      %s116 = sphi 0, %s102
      %s120 = sphi 0, %s120
      %s122 = sphi 0, %s120
      %s123 = sphi 0, %s122
      %s137 = sphi 0, %s123
      %s141 = sphi 0, %s141
      %s143 = sphi 0, %s141
      %s144 = sphi 0, %s143
      %s158 = sphi 0, %s144
      %s162 = sphi 0, %s162
      %s164 = sphi 0, %s162
      %s165 = sphi 0, %s164
      %s179 = sphi 0, %s165
      %s183 = sphi 0, %s183
      %s185 = sphi 0, %s183
      %s186 = sphi 0, %s185
      %s200 = sphi 0, %s186
      %s206 = sphi 0, %s208
      %s209 = sphi 0, %s206
      %s210 = sphi 0, %s209
      %s226 = sphi 0, %s210
    $region4: #{tpu_custom_call.1} parent=1 // loop_header_branch
      %26 = sbr.rel (%p24) target = $region8
    $region5: #{tpu_custom_call.1} parent=1 // loop_body
      %s28 = ssub.s32 %s23, 1
      %s29 = ssub.s32 %s23, 2
      %s30 = sadd.s32 %s23, 1
      %s32 = sadd.s32 %s31, 1
      %p35 = scmp.eq.s32.totalorder %s23, 1
      %p36 = scmp.ne.s32.totalorder %s31, %s33
      %p37 = scmp.eq.s32.totalorder %s23, 0
      %p38 = por %p36, %p37
      %p39 = scmp.ne.s32.totalorder %s31, %s33
      %p40 = scmp.eq.s32.totalorder %s28, 1
      %p41 = por %p39, %p40
      %p42 = scmp.ne.s32.totalorder %s33, %s34
      %p43 = scmp.eq.s32.totalorder %s28, 0
      %p44 = por %p42, %p43
      %p45 = scmp.ne.s32.totalorder %s33, %s34
      %p46 = scmp.eq.s32.totalorder %s29, 1
      %p47 = por %p45, %p46
      %p49 = scmp.ne.s32.totalorder %s34, %s48
      %p50 = scmp.eq.s32.totalorder %s29, 0
      %p51 = por %p49, %p50
      %s52 = ssub.s32 %s23, %s30
      %p53 = scmp.eq.s32.totalorder %s52, 0
      %s55 = sadd.s32 %s54, 1
      %s56 = scalar_select %p53, %s54, %s55
      %p59 = pneg %p53
      %p60 = scmp.eq.s32.totalorder %s23, 1
      %p61 = por %p59, %p60
      %p62 = scmp.ne.s32.totalorder %s54, %s57
      %p63 = scmp.eq.s32.totalorder %s23, 0
      %p64 = por %p62, %p63
      %p65 = scmp.ne.s32.totalorder %s54, %s57
      %p66 = scmp.eq.s32.totalorder %s28, 1
      %p67 = por %p65, %p66
      %p68 = scmp.ne.s32.totalorder %s57, %s58
      %p69 = scmp.eq.s32.totalorder %s28, 0
      %p70 = por %p68, %p69
      %p71 = scmp.ne.s32.totalorder %s57, %s58
      %p72 = scmp.eq.s32.totalorder %s29, 1
      %p73 = por %p71, %p72
      %p75 = scmp.ne.s32.totalorder %s58, %s74
      %p76 = scmp.eq.s32.totalorder %s29, 0
      %p77 = por %p75, %p76
      %s79 = sadd.s32 %s78, 1
      %p82 = scmp.eq.s32.totalorder %s23, 1
      %p83 = scmp.ne.s32.totalorder %s78, %s80
      %p84 = scmp.eq.s32.totalorder %s23, 0
      %p85 = por %p83, %p84
      %p86 = scmp.ne.s32.totalorder %s78, %s80
      %p87 = scmp.eq.s32.totalorder %s28, 1
      %p88 = por %p86, %p87
      %p89 = scmp.ne.s32.totalorder %s80, %s81
      %p90 = scmp.eq.s32.totalorder %s28, 0
      %p91 = por %p89, %p90
      %p92 = scmp.ne.s32.totalorder %s80, %s81
      %p93 = scmp.eq.s32.totalorder %s29, 1
      %p94 = por %p92, %p93
      %p96 = scmp.ne.s32.totalorder %s81, %s95
      %p97 = scmp.eq.s32.totalorder %s29, 0
      %p98 = por %p96, %p97
      %s100 = sadd.s32 %s99, 1
      %p103 = scmp.eq.s32.totalorder %s23, 1
      %p104 = scmp.ne.s32.totalorder %s99, %s101
      %p105 = scmp.eq.s32.totalorder %s23, 0
      %p106 = por %p104, %p105
      %p107 = scmp.ne.s32.totalorder %s99, %s101
      %p108 = scmp.eq.s32.totalorder %s28, 1
      %p109 = por %p107, %p108
      %p110 = scmp.ne.s32.totalorder %s101, %s102
      %p111 = scmp.eq.s32.totalorder %s28, 0
      %p112 = por %p110, %p111
      %p113 = scmp.ne.s32.totalorder %s101, %s102
      %p114 = scmp.eq.s32.totalorder %s29, 1
      %p115 = por %p113, %p114
      %p117 = scmp.ne.s32.totalorder %s102, %s116
      %p118 = scmp.eq.s32.totalorder %s29, 0
      %p119 = por %p117, %p118
      %s121 = sadd.s32 %s120, 1
      %p124 = scmp.eq.s32.totalorder %s23, 1
      %p125 = scmp.ne.s32.totalorder %s120, %s122
      %p126 = scmp.eq.s32.totalorder %s23, 0
      %p127 = por %p125, %p126
      %p128 = scmp.ne.s32.totalorder %s120, %s122
      %p129 = scmp.eq.s32.totalorder %s28, 1
      %p130 = por %p128, %p129
      %p131 = scmp.ne.s32.totalorder %s122, %s123
      %p132 = scmp.eq.s32.totalorder %s28, 0
      %p133 = por %p131, %p132
      %p134 = scmp.ne.s32.totalorder %s122, %s123
      %p135 = scmp.eq.s32.totalorder %s29, 1
      %p136 = por %p134, %p135
      %p138 = scmp.ne.s32.totalorder %s123, %s137
      %p139 = scmp.eq.s32.totalorder %s29, 0
      %p140 = por %p138, %p139
      %s142 = sadd.s32 %s141, 1
      %p145 = scmp.eq.s32.totalorder %s23, 1
      %p146 = scmp.ne.s32.totalorder %s141, %s143
      %p147 = scmp.eq.s32.totalorder %s23, 0
      %p148 = por %p146, %p147
      %p149 = scmp.ne.s32.totalorder %s141, %s143
      %p150 = scmp.eq.s32.totalorder %s28, 1
      %p151 = por %p149, %p150
      %p152 = scmp.ne.s32.totalorder %s143, %s144
      %p153 = scmp.eq.s32.totalorder %s28, 0
      %p154 = por %p152, %p153
      %p155 = scmp.ne.s32.totalorder %s143, %s144
      %p156 = scmp.eq.s32.totalorder %s29, 1
      %p157 = por %p155, %p156
      %p159 = scmp.ne.s32.totalorder %s144, %s158
      %p160 = scmp.eq.s32.totalorder %s29, 0
      %p161 = por %p159, %p160
      %s163 = sadd.s32 %s162, 1
      %p166 = scmp.eq.s32.totalorder %s23, 1
      %p167 = scmp.ne.s32.totalorder %s162, %s164
      %p168 = scmp.eq.s32.totalorder %s23, 0
      %p169 = por %p167, %p168
      %p170 = scmp.ne.s32.totalorder %s162, %s164
      %p171 = scmp.eq.s32.totalorder %s28, 1
      %p172 = por %p170, %p171
      %p173 = scmp.ne.s32.totalorder %s164, %s165
      %p174 = scmp.eq.s32.totalorder %s28, 0
      %p175 = por %p173, %p174
      %p176 = scmp.ne.s32.totalorder %s164, %s165
      %p177 = scmp.eq.s32.totalorder %s29, 1
      %p178 = por %p176, %p177
      %p180 = scmp.ne.s32.totalorder %s165, %s179
      %p181 = scmp.eq.s32.totalorder %s29, 0
      %p182 = por %p180, %p181
      %s184 = sadd.s32 %s183, 1
      %p187 = scmp.eq.s32.totalorder %s23, 1
      %p188 = scmp.ne.s32.totalorder %s183, %s185
      %p189 = scmp.eq.s32.totalorder %s23, 0
      %p190 = por %p188, %p189
      %p191 = scmp.ne.s32.totalorder %s183, %s185
      %p192 = scmp.eq.s32.totalorder %s28, 1
      %p193 = por %p191, %p192
      %p194 = scmp.ne.s32.totalorder %s185, %s186
      %p195 = scmp.eq.s32.totalorder %s28, 0
      %p196 = por %p194, %p195
      %p197 = scmp.ne.s32.totalorder %s185, %s186
      %p198 = scmp.eq.s32.totalorder %s29, 1
      %p199 = por %p197, %p198
      %p201 = scmp.ne.s32.totalorder %s186, %s200
      %p202 = scmp.eq.s32.totalorder %s29, 0
      %p203 = por %p201, %p202
      %s204 = ssub.s32 %s23, %s30
      %p205 = scmp.eq.s32.totalorder %s204, 0
      %s207 = sadd.s32 %s206, 1
      %s208 = scalar_select %p205, %s206, %s207
      %p211 = pneg %p205
      %p212 = scmp.eq.s32.totalorder %s23, 1
      %p213 = por %p211, %p212
      %p214 = scmp.ne.s32.totalorder %s206, %s209
      %p215 = scmp.eq.s32.totalorder %s23, 0
      %p216 = por %p214, %p215
      %p217 = scmp.ne.s32.totalorder %s206, %s209
      %p218 = scmp.eq.s32.totalorder %s28, 1
      %p219 = por %p217, %p218
      %p220 = scmp.ne.s32.totalorder %s209, %s210
      %p221 = scmp.eq.s32.totalorder %s28, 0
      %p222 = por %p220, %p221
      %p223 = scmp.ne.s32.totalorder %s209, %s210
      %p224 = scmp.eq.s32.totalorder %s29, 1
      %p225 = por %p223, %p224
      %p227 = scmp.ne.s32.totalorder %s210, %s226
      %p228 = scmp.eq.s32.totalorder %s29, 0
      %p229 = por %p227, %p228
      %p230 = scmp.le.s32.totalorder 1, %s23
      %p231 = scmp.lt.s32.totalorder %s23, 3
      %p232 = pnand %p230, %p231
      %p233 = pneg %p232
      // Predicated region
      $region9: #{tpu_custom_call.1} parent=5 // pred_check
        _
      $region10: #{tpu_custom_call.1} parent=5 // pred_check_branch
        %235 = sbr.rel (%p232) target = $region12
      $region11: #{tpu_custom_call.1} parent=5 // pred_region
        %s236 = ssub.s32 %s23, 1
        // Predicated region
        $region13: #{tpu_custom_call.1} parent=11 // pred_check
          %p237 = pneg %p44
        $region14: #{tpu_custom_call.1} parent=11 // pred_check_branch
          %239 = sbr.rel (%p237) target = $region16
        $region15: #{tpu_custom_call.1} parent=11 // pred_region
          %s241 = ssub.s32 16, 16
          %242 = vsyncadd [#allocation5], %s241
          %245 = dma.hbm_to_smem %s0, 16, [#allocation2], [#allocation5]
        $region16: #{tpu_custom_call.1} parent=11 // pred_fallthru
          _
        // Predicated region
        $region17: #{tpu_custom_call.1} parent=11 // pred_check
          %p246 = pneg %p91
        $region18: #{tpu_custom_call.1} parent=11 // pred_check_branch
          %248 = sbr.rel (%p246) target = $region20
        $region19: #{tpu_custom_call.1} parent=11 // pred_region
          %s250 = ssub.s32 3200, 3200
          %251 = vsyncadd [#allocation8], %s250
          %s252 = sshll.u32 [#allocation7], 4
          %s253 = int_to_ptr.vmem [resolvable:$true] %s252
          %258 = dma.hbm_to_vmem [thread:$0]  %s2, 3200, %s253, [#allocation8], 128, 128, 8
        $region20: #{tpu_custom_call.1} parent=11 // pred_fallthru
          _
        // Predicated region
        $region21: #{tpu_custom_call.1} parent=11 // pred_check
          %p259 = pneg %p112
        $region22: #{tpu_custom_call.1} parent=11 // pred_check_branch
          %261 = sbr.rel (%p259) target = $region24
        $region23: #{tpu_custom_call.1} parent=11 // pred_region
          _
        $region24: #{tpu_custom_call.1} parent=11 // pred_fallthru
          _
        // Predicated region
        $region25: #{tpu_custom_call.1} parent=11 // pred_check
          %p262 = pneg %p133
        $region26: #{tpu_custom_call.1} parent=11 // pred_check_branch
          %264 = sbr.rel (%p262) target = $region28
        $region27: #{tpu_custom_call.1} parent=11 // pred_region
          %s266 = ssub.s32 2048, 2048
          %267 = vsyncadd [#allocation8], %s266
          %s268 = sshll.u32 [#allocation9], 4
          %s269 = int_to_ptr.vmem [resolvable:$true] %s268
          %274 = dma.hbm_to_vmem [thread:$0]  %s4, 2048, %s269, [#allocation8], 128, 128, 8
        $region28: #{tpu_custom_call.1} parent=11 // pred_fallthru
          _
        // Predicated region
        $region29: #{tpu_custom_call.1} parent=11 // pred_check
          %p275 = pneg %p154
        $region30: #{tpu_custom_call.1} parent=11 // pred_check_branch
          %277 = sbr.rel (%p275) target = $region32
        $region31: #{tpu_custom_call.1} parent=11 // pred_region
          _
        $region32: #{tpu_custom_call.1} parent=11 // pred_fallthru
          _
        // Predicated region
        $region33: #{tpu_custom_call.1} parent=11 // pred_check
          %p278 = pneg %p175
        $region34: #{tpu_custom_call.1} parent=11 // pred_check_branch
          %280 = sbr.rel (%p278) target = $region36
        $region35: #{tpu_custom_call.1} parent=11 // pred_region
          %s282 = ssub.s32 2048, 2048
          %283 = vsyncadd [#allocation11], %s282
          %s284 = sshll.u32 [#allocation10], 4
          %s285 = int_to_ptr.vmem [resolvable:$true] %s284
          %290 = dma.hbm_to_vmem [thread:$0]  %s6, 2048, %s285, [#allocation11], 128, 128, 8
        $region36: #{tpu_custom_call.1} parent=11 // pred_fallthru
          _
        // Predicated region
        $region37: #{tpu_custom_call.1} parent=11 // pred_check
          %p291 = pneg %p196
        $region38: #{tpu_custom_call.1} parent=11 // pred_check_branch
          %293 = sbr.rel (%p291) target = $region40
        $region39: #{tpu_custom_call.1} parent=11 // pred_region
          _
        $region40: #{tpu_custom_call.1} parent=11 // pred_fallthru
          _
      $region12: #{tpu_custom_call.1} parent=5 // pred_fallthru
        _
      %p294 = scmp.lt.s32.totalorder %s23, 2
      // Predicated region
      $region41: #{tpu_custom_call.1} parent=5 // pred_check
        %p295 = pneg %p294
      $region42: #{tpu_custom_call.1} parent=5 // pred_check_branch
        %297 = sbr.rel (%p295) target = $region44
      $region43: #{tpu_custom_call.1} parent=5 // pred_region
        // Predicated region
        $region45: #{tpu_custom_call.1} parent=43 // pred_check
          %p298 = pneg %p64
        $region46: #{tpu_custom_call.1} parent=43 // pred_check_branch
          %300 = sbr.rel (%p298) target = $region48
        $region47: #{tpu_custom_call.1} parent=43 // pred_region
          %s301 = sand.u32 %s54, 1
          %s302 = scalar_lea.sflag [#allocation3], %s301
          %s303 = sand.u32 %s54, 1
          %s304 = smul.addr %s303, 32
          %s305 = scalar_lea.vmem [#allocation6], %s304
          %s306 = smul.u32 2, %s23
          %s308 = ssub.s32 512, 512
          %309 = vsyncadd %s302, %s308
          %s310 = smul.addr %s306, 2
          %s311 = smul.addr %s310, 128
          %s312 = scalar_lea.hbm %s1, %s311
          %s313 = sshll.u32 %s305, 4
          %s314 = int_to_ptr.vmem [resolvable:$true] %s313
          %319 = dma.hbm_to_vmem [thread:$0]  %s312, 512, %s314, %s302, 256, 256, 16
        $region48: #{tpu_custom_call.1} parent=43 // pred_fallthru
          _
      $region44: #{tpu_custom_call.1} parent=5 // pred_fallthru
        _
      %p320 = scmp.le.s32.totalorder 1, %s23
      %p321 = scmp.lt.s32.totalorder %s23, 3
      %p322 = pnand %p320, %p321
      %p323 = pneg %p322
      // Predicated region
      $region49: #{tpu_custom_call.1} parent=5 // pred_check
        _
      $region50: #{tpu_custom_call.1} parent=5 // pred_check_branch
        %325 = sbr.rel (%p322) target = $region52
      $region51: #{tpu_custom_call.1} parent=5 // pred_region
        %s326 = ssub.s32 %s23, 1
        // Predicated region
        $region53: #{tpu_custom_call.1} parent=51 // pred_check
          %p327 = pneg %p44
        $region54: #{tpu_custom_call.1} parent=51 // pred_check_branch
          %329 = sbr.rel (%p327) target = $region56
        $region55: #{tpu_custom_call.1} parent=51 // pred_region
          %330 = dma.done [#allocation5], 16
        $region56: #{tpu_custom_call.1} parent=51 // pred_fallthru
          _
        %s331 = sand.u32 %s57, 1
        %s332 = scalar_lea.sflag [#allocation3], %s331
        %s333 = sand.u32 %s57, 1
        %s334 = smul.addr %s333, 32
        %s335 = scalar_lea.vmem [#allocation6], %s334
        // Predicated region
        $region57: #{tpu_custom_call.1} parent=51 // pred_check
          %p336 = pneg %p70
        $region58: #{tpu_custom_call.1} parent=51 // pred_check_branch
          %338 = sbr.rel (%p336) target = $region60
        $region59: #{tpu_custom_call.1} parent=51 // pred_region
          %339 = dma.done %s332, 512
        $region60: #{tpu_custom_call.1} parent=51 // pred_fallthru
          _
        // Predicated region
        $region61: #{tpu_custom_call.1} parent=51 // pred_check
          %p340 = pneg %p91
        $region62: #{tpu_custom_call.1} parent=51 // pred_check_branch
          %342 = sbr.rel (%p340) target = $region64
        $region63: #{tpu_custom_call.1} parent=51 // pred_region
          %343 = dma.done [#allocation8], 3200
        $region64: #{tpu_custom_call.1} parent=51 // pred_fallthru
          _
        // Predicated region
        $region65: #{tpu_custom_call.1} parent=51 // pred_check
          %p344 = pneg %p133
        $region66: #{tpu_custom_call.1} parent=51 // pred_check_branch
          %346 = sbr.rel (%p344) target = $region68
        $region67: #{tpu_custom_call.1} parent=51 // pred_region
          %347 = dma.done [#allocation8], 2048
        $region68: #{tpu_custom_call.1} parent=51 // pred_fallthru
          _
        // Predicated region
        $region69: #{tpu_custom_call.1} parent=51 // pred_check
          %p348 = pneg %p175
        $region70: #{tpu_custom_call.1} parent=51 // pred_check_branch
          %350 = sbr.rel (%p348) target = $region72
        $region71: #{tpu_custom_call.1} parent=51 // pred_region
          %351 = dma.done [#allocation11], 2048
        $region72: #{tpu_custom_call.1} parent=51 // pred_fallthru
          _
        %352 = sfence
        %p353 = pneg %p44
        %p354 = pneg %p41
        %s355 = sand.u32 %s57, 1
        %s356 = scalar_lea.sflag [#allocation3], %s355
        %s357 = sand.u32 %s57, 1
        %s358 = smul.addr %s357, 32
        %s359 = scalar_lea.vmem [#allocation6], %s358
        %p360 = pneg %p70
        %p361 = pneg %p67
        %p362 = pneg %p91
        %p363 = pneg %p88
        %p364 = pneg %p112
        %p365 = pneg %p109
        %p366 = pneg %p133
        %p367 = pneg %p130
        %p368 = pneg %p154
        %p369 = pneg %p151
        %p370 = pneg %p175
        %p371 = pneg %p172
        %p372 = pneg %p196
        %p373 = pneg %p193
        %p374 = pneg %p222
        %p375 = pneg %p219
        %s376 = sand.u32 %s209, 1
        %s377 = scalar_lea.sflag [#allocation4], %s376
        %s378 = sand.u32 %s209, 1
        %s379 = smul.addr %s378, 16
        %s380 = scalar_lea.vmem [#allocation12], %s379
        %s381 = smul.u32 2, %s28
        %s382 = smul.u32 2, %s28
        %s383 = sld [smem:[#allocation2]]
        %s384 = sld [smem:[#allocation2 + $0x1]]
        %v385 = vld [vmem:[%s335] sm:$0xff]
        %v386 = vld [vmem:[%s335 + $0x8] sm:$0xff]
        %v387 = vld [vmem:[%s335 + $0x10] sm:$0xff]
        %v388 = vld [vmem:[%s335 + $0x18] sm:$0xff]
        %v389 = vld [vmem:[#allocation7] sm:$0xff]
        %v390 = vld [vmem:[#allocation7 + $0x8] sm:$0xff]
        %v391 = vld [vmem:[#allocation7 + $0x10] sm:$0xff]
        %v392 = vld [vmem:[#allocation7 + $0x18] sm:$0xff]
        %v393 = vld [vmem:[#allocation7 + $0x20] sm:$0xff]
        %v394 = vld [vmem:[#allocation7 + $0x28] sm:$0xff]
        %v395 = vld [vmem:[#allocation7 + $0x30] sm:$0xff]
        %v396 = vld [vmem:[#allocation7 + $0x38] sm:$0xff]
        %v397 = vld [vmem:[#allocation7 + $0x40] sm:$0xff]
        %v398 = vld [vmem:[#allocation7 + $0x48] sm:$0xff]
        %v399 = vld [vmem:[#allocation7 + $0x50] sm:$0xff]
        %v400 = vld [vmem:[#allocation7 + $0x58] sm:$0xff]
        %v401 = vld [vmem:[#allocation7 + $0x60] sm:$0xff]
        %v402 = vld [vmem:[#allocation7 + $0x68] sm:$0xff]
        %v403 = vld [vmem:[#allocation7 + $0x70] sm:$0xff]
        %v404 = vld [vmem:[#allocation7 + $0x78] sm:$0xff]
        %v405 = vld [vmem:[#allocation7 + $0x80] sm:$0xff]
        %v406 = vld [vmem:[#allocation7 + $0x88] sm:$0xff]
        %v407 = vld [vmem:[#allocation7 + $0x90] sm:$0xff]
        %v408 = vld [vmem:[#allocation7 + $0x98] sm:$0xff]
        %v409 = vld [vmem:[#allocation7 + $0xa0] sm:$0xff]
        %v410 = vld [vmem:[#allocation7 + $0xa8] sm:$0xff]
        %v411 = vld [vmem:[#allocation7 + $0xb0] sm:$0xff]
        %v412 = vld [vmem:[#allocation7 + $0xb8] sm:$0xff]
        %v413 = vld [vmem:[#allocation7 + $0xc0] sm:$0xff]
        %v414 = vld [vmem:[%s3] sm:$0x1]
        %v416 = vlaneseq
        %v417 = vshrl.u32 %v416, 7
        %v418 = vsub.s32 0, %v417
        %v419 = vrot.slane %v414, %v418
        %vm421 = vcmask 588800
        %v423 = vsel %vm421, %v386, 0
        %v426 = vsel %vm421, %v388, 0
        %428 = vmatprep.subr.mxu0 0.0
        %429 = vmatpush1.msra.mxu0 %v404
        %430 = vmatprep.subr.mxu0 0.0
        %431 = vmatpush1.msra.mxu0 %v403
        %432 = vmatprep.subr.mxu0 0.0
        %433 = vmatpush1.msra.mxu0 %v402
        %434 = vmatprep.subr.mxu0 0.0
        %435 = vmatpush1.msra.mxu0 %v401
        %436 = vmatprep.subr.mxu0 0.0
        %437 = vmatpush1.msra.mxu0 %v400
        %438 = vmatprep.subr.mxu0 0.0
        %439 = vmatpush1.msra.mxu0 %v399
        %440 = vmatprep.subr.mxu0 0.0
        %441 = vmatpush1.msra.mxu0 %v398
        %442 = vmatprep.subr.mxu0 0.0
        %443 = vmatpush1.msra.mxu0 %v397
        %444 = vmatprep.subr.mxu0 0.0
        %445 = vmatpush1.msra.mxu0 %v396
        %446 = vmatprep.subr.mxu0 0.0
        %447 = vmatpush1.msra.mxu0 %v395
        %448 = vmatprep.subr.mxu0 0.0
        %449 = vmatpush1.msra.mxu0 %v394
        %450 = vmatprep.subr.mxu0 0.0
        %451 = vmatpush1.msra.mxu0 %v393
        %452 = vmatprep.subr.mxu0 0.0
        %453 = vmatpush1.msra.mxu0 %v392
        %454 = vmatprep.subr.mxu0 0.0
        %455 = vmatpush1.msra.mxu0 %v391
        %456 = vmatprep.subr.mxu0 0.0
        %457 = vmatpush1.msra.mxu0 %v390
        %458 = vmatprep.subr.mxu0 0.0
        %459 = vmatpush1.msra.mxu0 %v389
        %460 = vmatprep.subr.mxu0 0.0
        %461 = vmatpush2.msra.mxu0 0.0
        %462 = vmatprep.subr.mxu0 0.0
        %463 = vmatpush2.msra.mxu0 0.0
        %464 = vmatprep.subr.mxu0 0.0
        %465 = vmatpush2.msra.mxu0 0.0
        %466 = vmatprep.subr.mxu0 0.0
        %467 = vmatpush2.msra.mxu0 0.0
        %468 = vmatprep.subr.mxu0 0.0
        %469 = vmatpush2.msra.mxu0 0.0
        %470 = vmatprep.subr.mxu0 0.0
        %471 = vmatpush2.msra.mxu0 0.0
        %472 = vmatprep.subr.mxu0 0.0
        %473 = vmatpush2.msra.mxu0 0.0
        %474 = vmatprep.subr.mxu0 0.0
        %475 = vmatpush2.msra.mxu0 %v413
        %476 = vmatprep.subr.mxu0 0.0
        %477 = vmatpush2.msra.mxu0 %v412
        %478 = vmatprep.subr.mxu0 0.0
        %479 = vmatpush2.msra.mxu0 %v411
        %480 = vmatprep.subr.mxu0 0.0
        %481 = vmatpush2.msra.mxu0 %v410
        %482 = vmatprep.subr.mxu0 0.0
        %483 = vmatpush2.msra.mxu0 %v409
        %484 = vmatprep.subr.mxu0 0.0
        %485 = vmatpush2.msra.mxu0 %v408
        %486 = vmatprep.subr.mxu0 0.0
        %487 = vmatpush2.msra.mxu0 %v407
        %488 = vmatprep.subr.mxu0 0.0
        %489 = vmatpush2.msra.mxu0 %v406
        %490 = vmatprep.subr.mxu0 0.0
        %491 = vmatpush2.msra.mxu0 %v405
        %492 = vmatprep.mubr.f32.mxu0 %v423
        %493 = vmatmul.mubr.f32.gmra.mxu0 %v385
        %v494 = vpop.f32.mrf.mxu0
        %v495 = vadd.f32 %v419, %v494
        %v496 = vpop.f32.mrf.mxu0
        %497 = vmatprep.mubr.f32.mxu0 %v426
        %498 = vmatmul.mubr.f32.gmra.mxu0 %v387
        %v499 = vpop.f32.mrf.mxu0
        %v500 = vadd.f32 %v419, %v499
        %v501 = vpop.f32.mrf.mxu0
        %502 = vdwg.mxu0
        %vm503 = vcmp.gt.f32.partialorder %v495, 0.0
        %vm504 = vcmp.gt.f32.partialorder %v500, 0.0
        %v505 = vstv %s383
        %v506 = vmul.f32 %v505, %v495
        %v507 = vmul.f32 %v505, %v500
        %v508 = vsel %vm503, %v495, %v506
        %v509 = vsel %vm504, %v500, %v507
        %v510 = vld [vmem:[#allocation9] sm:$0xff]
        %v511 = vld [vmem:[#allocation9 + $0x8] sm:$0xff]
        %v512 = vld [vmem:[#allocation9 + $0x10] sm:$0xff]
        %v513 = vld [vmem:[#allocation9 + $0x18] sm:$0xff]
        %v514 = vld [vmem:[#allocation9 + $0x20] sm:$0xff]
        %v515 = vld [vmem:[#allocation9 + $0x28] sm:$0xff]
        %v516 = vld [vmem:[#allocation9 + $0x30] sm:$0xff]
        %v517 = vld [vmem:[#allocation9 + $0x38] sm:$0xff]
        %v518 = vld [vmem:[#allocation9 + $0x40] sm:$0xff]
        %v519 = vld [vmem:[#allocation9 + $0x48] sm:$0xff]
        %v520 = vld [vmem:[#allocation9 + $0x50] sm:$0xff]
        %v521 = vld [vmem:[#allocation9 + $0x58] sm:$0xff]
        %v522 = vld [vmem:[#allocation9 + $0x60] sm:$0xff]
        %v523 = vld [vmem:[#allocation9 + $0x68] sm:$0xff]
        %v524 = vld [vmem:[#allocation9 + $0x70] sm:$0xff]
        %v525 = vld [vmem:[#allocation9 + $0x78] sm:$0xff]
        %v526 = vld [vmem:[%s5] sm:$0x1]
        %v528 = vlaneseq
        %v529 = vshrl.u32 %v528, 7
        %v530 = vsub.s32 0, %v529
        %v531 = vrot.slane %v526, %v530
        %533 = vmatprep.subr.mxu0 0.0
        %534 = vmatpush1.msra.mxu0 %v525
        %535 = vmatprep.subr.mxu0 0.0
        %536 = vmatpush1.msra.mxu0 %v524
        %537 = vmatprep.subr.mxu0 0.0
        %538 = vmatpush1.msra.mxu0 %v523
        %539 = vmatprep.subr.mxu0 0.0
        %540 = vmatpush1.msra.mxu0 %v522
        %541 = vmatprep.subr.mxu0 0.0
        %542 = vmatpush1.msra.mxu0 %v521
        %543 = vmatprep.subr.mxu0 0.0
        %544 = vmatpush1.msra.mxu0 %v520
        %545 = vmatprep.subr.mxu0 0.0
        %546 = vmatpush1.msra.mxu0 %v519
        %547 = vmatprep.subr.mxu0 0.0
        %548 = vmatpush1.msra.mxu0 %v518
        %549 = vmatprep.subr.mxu0 0.0
        %550 = vmatpush1.msra.mxu0 %v517
        %551 = vmatprep.subr.mxu0 0.0
        %552 = vmatpush1.msra.mxu0 %v516
        %553 = vmatprep.subr.mxu0 0.0
        %554 = vmatpush1.msra.mxu0 %v515
        %555 = vmatprep.subr.mxu0 0.0
        %556 = vmatpush1.msra.mxu0 %v514
        %557 = vmatprep.subr.mxu0 0.0
        %558 = vmatpush1.msra.mxu0 %v513
        %559 = vmatprep.subr.mxu0 0.0
        %560 = vmatpush1.msra.mxu0 %v512
        %561 = vmatprep.subr.mxu0 0.0
        %562 = vmatpush1.msra.mxu0 %v511
        %563 = vmatprep.subr.mxu0 0.0
        %564 = vmatpush1.msra.mxu0 %v510
        %565 = vmatprep.subr.mxu0 0.0
        %566 = vmatpush2.msra.mxu0 0.0
        %567 = vmatprep.subr.mxu0 0.0
        %568 = vmatpush2.msra.mxu0 0.0
        %569 = vmatprep.subr.mxu0 0.0
        %570 = vmatpush2.msra.mxu0 0.0
        %571 = vmatprep.subr.mxu0 0.0
        %572 = vmatpush2.msra.mxu0 0.0
        %573 = vmatprep.subr.mxu0 0.0
        %574 = vmatpush2.msra.mxu0 0.0
        %575 = vmatprep.subr.mxu0 0.0
        %576 = vmatpush2.msra.mxu0 0.0
        %577 = vmatprep.subr.mxu0 0.0
        %578 = vmatpush2.msra.mxu0 0.0
        %579 = vmatprep.subr.mxu0 0.0
        %580 = vmatpush2.msra.mxu0 0.0
        %581 = vmatprep.subr.mxu0 0.0
        %582 = vmatpush2.msra.mxu0 0.0
        %583 = vmatprep.subr.mxu0 0.0
        %584 = vmatpush2.msra.mxu0 0.0
        %585 = vmatprep.subr.mxu0 0.0
        %586 = vmatpush2.msra.mxu0 0.0
        %587 = vmatprep.subr.mxu0 0.0
        %588 = vmatpush2.msra.mxu0 0.0
        %589 = vmatprep.subr.mxu0 0.0
        %590 = vmatpush2.msra.mxu0 0.0
        %591 = vmatprep.subr.mxu0 0.0
        %592 = vmatpush2.msra.mxu0 0.0
        %593 = vmatprep.subr.mxu0 0.0
        %594 = vmatpush2.msra.mxu0 0.0
        %595 = vmatprep.subr.mxu0 0.0
        %596 = vmatpush2.msra.mxu0 0.0
        %597 = vmatprep.mubr.f32.mxu0 0.0
        %598 = vmatmul.mubr.f32.gmra.mxu0 %v508
        %v599 = vpop.f32.mrf.mxu0
        %v600 = vadd.f32 %v531, %v599
        %v601 = vpop.f32.mrf.mxu0
        %602 = vmatprep.mubr.f32.mxu0 0.0
        %603 = vmatmul.mubr.f32.gmra.mxu0 %v509
        %v604 = vpop.f32.mrf.mxu0
        %v605 = vadd.f32 %v531, %v604
        %v606 = vpop.f32.mrf.mxu0
        %607 = vdwg.mxu0
        %vm608 = vcmp.gt.f32.partialorder %v600, 0.0
        %vm609 = vcmp.gt.f32.partialorder %v605, 0.0
        %v610 = vstv %s384
        %v611 = vmul.f32 %v610, %v600
        %v612 = vmul.f32 %v610, %v605
        %v613 = vsel %vm608, %v600, %v611
        %v614 = vsel %vm609, %v605, %v612
        %v615 = vld [vmem:[#allocation10] sm:$0xff]
        %v616 = vld [vmem:[#allocation10 + $0x8] sm:$0xff]
        %v617 = vld [vmem:[#allocation10 + $0x10] sm:$0xff]
        %v618 = vld [vmem:[#allocation10 + $0x18] sm:$0xff]
        %v619 = vld [vmem:[#allocation10 + $0x20] sm:$0xff]
        %v620 = vld [vmem:[#allocation10 + $0x28] sm:$0xff]
        %v621 = vld [vmem:[#allocation10 + $0x30] sm:$0xff]
        %v622 = vld [vmem:[#allocation10 + $0x38] sm:$0xff]
        %v623 = vld [vmem:[#allocation10 + $0x40] sm:$0xff]
        %v624 = vld [vmem:[#allocation10 + $0x48] sm:$0xff]
        %v625 = vld [vmem:[#allocation10 + $0x50] sm:$0xff]
        %v626 = vld [vmem:[#allocation10 + $0x58] sm:$0xff]
        %v627 = vld [vmem:[#allocation10 + $0x60] sm:$0xff]
        %v628 = vld [vmem:[#allocation10 + $0x68] sm:$0xff]
        %v629 = vld [vmem:[#allocation10 + $0x70] sm:$0xff]
        %v630 = vld [vmem:[#allocation10 + $0x78] sm:$0xff]
        %v631 = vld [vmem:[%s7] sm:$0x1]
        %v633 = vlaneseq
        %v634 = vshrl.u32 %v633, 7
        %v635 = vsub.s32 0, %v634
        %v636 = vrot.slane %v631, %v635
        %638 = vmatprep.subr.mxu0 0.0
        %639 = vmatpush1.msra.mxu0 %v630
        %640 = vmatprep.subr.mxu0 0.0
        %641 = vmatpush1.msra.mxu0 %v629
        %642 = vmatprep.subr.mxu0 0.0
        %643 = vmatpush1.msra.mxu0 %v628
        %644 = vmatprep.subr.mxu0 0.0
        %645 = vmatpush1.msra.mxu0 %v627
        %646 = vmatprep.subr.mxu0 0.0
        %647 = vmatpush1.msra.mxu0 %v626
        %648 = vmatprep.subr.mxu0 0.0
        %649 = vmatpush1.msra.mxu0 %v625
        %650 = vmatprep.subr.mxu0 0.0
        %651 = vmatpush1.msra.mxu0 %v624
        %652 = vmatprep.subr.mxu0 0.0
        %653 = vmatpush1.msra.mxu0 %v623
        %654 = vmatprep.subr.mxu0 0.0
        %655 = vmatpush1.msra.mxu0 %v622
        %656 = vmatprep.subr.mxu0 0.0
        %657 = vmatpush1.msra.mxu0 %v621
        %658 = vmatprep.subr.mxu0 0.0
        %659 = vmatpush1.msra.mxu0 %v620
        %660 = vmatprep.subr.mxu0 0.0
        %661 = vmatpush1.msra.mxu0 %v619
        %662 = vmatprep.subr.mxu0 0.0
        %663 = vmatpush1.msra.mxu0 %v618
        %664 = vmatprep.subr.mxu0 0.0
        %665 = vmatpush1.msra.mxu0 %v617
        %666 = vmatprep.subr.mxu0 0.0
        %667 = vmatpush1.msra.mxu0 %v616
        %668 = vmatprep.subr.mxu0 0.0
        %669 = vmatpush1.msra.mxu0 %v615
        %670 = vmatprep.subr.mxu0 0.0
        %671 = vmatpush2.msra.mxu0 0.0
        %672 = vmatprep.subr.mxu0 0.0
        %673 = vmatpush2.msra.mxu0 0.0
        %674 = vmatprep.subr.mxu0 0.0
        %675 = vmatpush2.msra.mxu0 0.0
        %676 = vmatprep.subr.mxu0 0.0
        %677 = vmatpush2.msra.mxu0 0.0
        %678 = vmatprep.subr.mxu0 0.0
        %679 = vmatpush2.msra.mxu0 0.0
        %680 = vmatprep.subr.mxu0 0.0
        %681 = vmatpush2.msra.mxu0 0.0
        %682 = vmatprep.subr.mxu0 0.0
        %683 = vmatpush2.msra.mxu0 0.0
        %684 = vmatprep.subr.mxu0 0.0
        %685 = vmatpush2.msra.mxu0 0.0
        %686 = vmatprep.subr.mxu0 0.0
        %687 = vmatpush2.msra.mxu0 0.0
        %688 = vmatprep.subr.mxu0 0.0
        %689 = vmatpush2.msra.mxu0 0.0
        %690 = vmatprep.subr.mxu0 0.0
        %691 = vmatpush2.msra.mxu0 0.0
        %692 = vmatprep.subr.mxu0 0.0
        %693 = vmatpush2.msra.mxu0 0.0
        %694 = vmatprep.subr.mxu0 0.0
        %695 = vmatpush2.msra.mxu0 0.0
        %696 = vmatprep.subr.mxu0 0.0
        %697 = vmatpush2.msra.mxu0 0.0
        %698 = vmatprep.subr.mxu0 0.0
        %699 = vmatpush2.msra.mxu0 0.0
        %700 = vmatprep.subr.mxu0 0.0
        %701 = vmatpush2.msra.mxu0 0.0
        %702 = vmatprep.mubr.f32.mxu0 0.0
        %703 = vmatmul.mubr.f32.gmra.mxu0 %v613
        %v704 = vpop.f32.mrf.mxu0
        %v705 = vadd.f32 %v636, %v704
        %v706 = vpop.f32.mrf.mxu0
        %707 = vmatprep.mubr.f32.mxu0 0.0
        %708 = vmatmul.mubr.f32.gmra.mxu0 %v614
        %v709 = vpop.f32.mrf.mxu0
        %v710 = vadd.f32 %v636, %v709
        %v711 = vpop.f32.mrf.mxu0
        %712 = vdwg.mxu0
        %v713 = vmul.f32 %v705, %v705
        %v714 = vmul.f32 %v710, %v710
        %715 = vadd.xlane.f32.xlu0 %v713
        %v716 = vpop.xlane.xlu0 %715
        %717 = vadd.xlane.f32.xlu0 %v714
        %v718 = vpop.xlane.xlu0 %717
        %v719 = vmax.f32 %v716, 1e-24
        %v720 = vmax.f32 %v718, 1e-24
        %v721 = vrsqrt.pop %v719
        %v722 = vrsqrt.pop %v720
        %v723 = vmul.f32 %v705, %v721
        %v724 = vmul.f32 %v710, %v722
        %725 = vst [vmem:[%s380] sm:$0xff] %v723
        %726 = vst [vmem:[%s380 + $0x8] sm:$0xff] %v724
        %s727 = sand.u32 %s209, 1
        %s728 = scalar_lea.sflag [#allocation4], %s727
        %s729 = sand.u32 %s209, 1
        %s730 = smul.addr %s729, 16
        %s731 = scalar_lea.vmem [#allocation12], %s730
        // Predicated region
        $region73: #{tpu_custom_call.1} parent=51 // pred_check
          %p732 = pneg %p219
        $region74: #{tpu_custom_call.1} parent=51 // pred_check_branch
          %734 = sbr.rel (%p732) target = $region76
        $region75: #{tpu_custom_call.1} parent=51 // pred_region
          %s735 = smul.u32 2, %s28
          %s737 = ssub.s32 256, 256
          %738 = vsyncadd %s728, %s737
          %s739 = smul.addr %s735, 128
          %s740 = scalar_lea.hbm %s8, %s739
          %s741 = sshll.u32 %s731, 4
          %s742 = int_to_ptr.vmem [resolvable:$true] %s741
          %747 = dma.vmem_to_hbm [thread:$0]  %s742, 256, %s740, %s728, 128, 128, 8
        $region76: #{tpu_custom_call.1} parent=51 // pred_fallthru
          _
      $region52: #{tpu_custom_call.1} parent=5 // pred_fallthru
        _
      %p748 = scmp.le.s32.totalorder 2, %s23
      // Predicated region
      $region77: #{tpu_custom_call.1} parent=5 // pred_check
        %p749 = pneg %p748
      $region78: #{tpu_custom_call.1} parent=5 // pred_check_branch
        %751 = sbr.rel (%p749) target = $region80
      $region79: #{tpu_custom_call.1} parent=5 // pred_region
        %s752 = ssub.s32 %s23, 2
        // Predicated region
        $region81: #{tpu_custom_call.1} parent=79 // pred_check
          %p753 = pneg %p225
        $region82: #{tpu_custom_call.1} parent=79 // pred_check_branch
          %755 = sbr.rel (%p753) target = $region84
        $region83: #{tpu_custom_call.1} parent=79 // pred_region
          %s756 = sand.u32 %s210, 1
          %s757 = scalar_lea.sflag [#allocation4], %s756
          %s758 = sand.u32 %s210, 1
          %s759 = smul.addr %s758, 16
          %s760 = scalar_lea.vmem [#allocation12], %s759
          %761 = dma.done %s757, 256
        $region84: #{tpu_custom_call.1} parent=79 // pred_fallthru
          _
      $region80: #{tpu_custom_call.1} parent=5 // pred_fallthru
        _
    $region6: #{tpu_custom_call.1} parent=1 // loop_footer
      %s27 = sadd.s32 1, %s23
    $region7: #{tpu_custom_call.1} parent=1 // loop_footer_branch
      %22 = sbr.rel target = $region3
    $region8: #{tpu_custom_call.1} parent=1 // loop_exit
      _
    %762 = vsyncpa [#allocation3], 1
    %s763 = scalar_lea.sflag [#allocation3], 1
    %764 = vsyncpa %s763, 1
    %765 = vsyncpa [#allocation8], 1
    %766 = vsyncpa [#allocation11], 1
    %767 = vsyncpa [#allocation4], 1
    %s768 = scalar_lea.sflag [#allocation4], 1
    %769 = vsyncpa %s768, 1
    %770 = vsyncpa [#allocation5], 1
    %s771 = scalar_lea.sflag [#allocation5], 1
    %772 = vsyncpa %s771, 1

</llo_original>
